<compile_context>
chip_gen: v7x
topology: tpu7x:2x2x1
jax: 0.10.0
libtpu: 0.0.40
codegen_flags: <defaults>
</compile_context>

<pallas_src>
import numpy as np
import jax
import jax.numpy as jnp
from jax import lax
from jax.experimental import pallas as pl
from jax.experimental.pallas import tpu as pltpu

BN_EPS = 1e-5


# ---------------------------------------------------------------------------
# Fused 3x3 conv + BN (+ optional residual add and fused 1x1-stride downsample)
# ---------------------------------------------------------------------------
def _make_conv_kernel(*, Hq, Ho, Wo, Cin, stride, tn, has_ds, has_res):
    """Build a Pallas kernel: relu(BN(conv3x3(x))) [+res] [+ BN(ds_conv(x))]."""
    Mo = Ho * Wo

    def kernel(*refs):
        it = iter(refs)
        x_ref = next(it)          # (P*Hq, Wq, Cin)  bf16 phase-packed padded image
        w_ref = next(it)          # (9, Cin, tn)     bf16 conv weights (tap-major)
        s_ref = next(it)          # (1, tn)          f32  folded BN scale
        t_ref = next(it)          # (1, tn)          f32  folded BN shift
        if has_ds:
            wds_ref = next(it)    # (Cin, tn)        bf16 1x1 downsample weights
            sds_ref = next(it)    # (1, tn)          f32
            tds_ref = next(it)    # (1, tn)          f32
        if has_res:
            r_ref = next(it)      # (Mo, tn)         f32  residual
        out_ref = next(it)        # (Mo, tn)
        if has_ds:
            res_ref = next(it)    # (Mo, tn)         f32  downsample residual out

        acc = jnp.zeros((Mo, tn), jnp.float32)
        for kh in range(3):
            for kw in range(3):
                # Phase-packed addressing: output (oh, ow), tap (kh, kw) reads
                # phase p = (kh%s)*s + (kw%s) at rows oh + kh//s, cols ow + kw//s.
                p = (kh % stride) * stride + (kw % stride)
                r0 = p * Hq + kh // stride
                c0 = kw // stride
                patch = x_ref[r0:r0 + Ho, c0:c0 + Wo, :].reshape(Mo, Cin)
                acc = acc + jnp.dot(patch, w_ref[kh * 3 + kw],
                                    preferred_element_type=jnp.float32)
                if has_ds and kh == 1 and kw == 1:
                    # The centre tap of the pad-1 3x3/stride-s conv reads exactly
                    # x[s*oh, s*ow] == the input of the 1x1/stride-s downsample
                    # conv, so its patch is reused for the residual branch.
                    ds = jnp.dot(patch, wds_ref[...],
                                 preferred_element_type=jnp.float32)
                    res_ref[...] = (ds * sds_ref[...]
                                    + tds_ref[...]).astype(res_ref.dtype)

        y = acc * s_ref[...] + t_ref[...]
        if has_res:
            y = y + r_ref[...].astype(jnp.float32)
        out_ref[...] = jnp.maximum(y, 0.0).astype(out_ref.dtype)

    return kernel


def _phase_pack(x, stride):
    """Pad (B,H,W,C) spatially by 1 and space-to-batch the stride phases.

    Returns xs of shape (B, P*Hq, Wq, C) with P = stride*stride plus (P,Hq,Wq).
    Every conv tap then reads a *contiguous* (Ho, Wo) window of one phase, so
    the kernel never needs strided VMEM slicing.
    """
    B, H, W, C = x.shape
    xp = jnp.pad(x, ((0, 0), (1, 1), (1, 1), (0, 0)))
    if stride == 1:
        return xp, (1, H + 2, W + 2)
    assert stride == 2 and H % 2 == 0 and W % 2 == 0, \
        "only stride 1/2 with even spatial dims supported"
    Hq, Wq = (H + 2) // 2, (W + 2) // 2
    xs = xp.reshape(B, Hq, 2, Wq, 2, C)
    xs = jnp.transpose(xs, (0, 2, 4, 1, 3, 5))          # (B, h%2, w%2, Hq, Wq, C)
    return xs.reshape(B, 4 * Hq, Wq, C), (4, Hq, Wq)


def fused_conv3x3_bn(x, w, bn, *, stride=1, residual=None, ds_w=None,
                     ds_bn=None, out_dtype=jnp.bfloat16):
    """relu(BN(conv3x3_pad1_stride_s(x))) as ONE Pallas kernel.

    Optionally fuses a residual add before the ReLU, or (downsample path)
    additionally emits BN(conv1x1_stride_s(x)) as a second output computed
    from conv1's centre-tap patch.  x: (B, H, W, Cin) NHWC.
    Returns (B, Ho*Wo, Cout) [, (B, Ho*Wo, Cout) f32 residual].
    """
    B, H, W, Cin = x.shape
    Cout = w.shape[-1]
    Ho = (H + 2 - 3) // stride + 1
    Wo = (W + 2 - 3) // stride + 1
    Mo = Ho * Wo

    xs, (P, Hq, Wq) = _phase_pack(x.astype(jnp.bfloat16), stride)

    # N tiling: MXU-native 128-multiples when they divide Cout, else the full
    # Cout (full-extent blocks are always legal).  No zero-padded columns.
    if Cout % 256 == 0:
        tn = 256
    elif Cout % 128 == 0:
        tn = 128
    else:
        tn = Cout
    n_tiles = Cout // tn

    has_ds = ds_w is not None
    has_res = residual is not None

    x_spec = pl.BlockSpec((None, P * Hq, Wq, Cin), lambda b, j: (b, 0, 0, 0))
    w_spec = pl.BlockSpec((9, Cin, tn), lambda b, j: (0, 0, j))
    col_spec = pl.BlockSpec((1, tn), lambda b, j: (0, j))
    mo_spec = pl.BlockSpec((None, Mo, tn), lambda b, j: (b, 0, j))

    in_specs = [x_spec, w_spec, col_spec, col_spec]
    args = [xs,
            w.reshape(9, Cin, Cout).astype(jnp.bfloat16),
            bn['scale'].reshape(1, Cout).astype(jnp.float32),
            bn['shift'].reshape(1, Cout).astype(jnp.float32)]
    if has_ds:
        in_specs += [pl.BlockSpec((Cin, tn), lambda b, j: (0, j)),
                     col_spec, col_spec]
        args += [ds_w.reshape(Cin, Cout).astype(jnp.bfloat16),
                 ds_bn['scale'].reshape(1, Cout).astype(jnp.float32),
                 ds_bn['shift'].reshape(1, Cout).astype(jnp.float32)]
    if has_res:
        in_specs.append(mo_spec)
        args.append(residual)

    kernel = _make_conv_kernel(Hq=Hq, Ho=Ho, Wo=Wo, Cin=Cin, stride=stride,
                               tn=tn, has_ds=has_ds, has_res=has_res)

    if has_ds:
        out_shape = [jax.ShapeDtypeStruct((B, Mo, Cout), out_dtype),
                     jax.ShapeDtypeStruct((B, Mo, Cout), jnp.float32)]
        out_specs = [mo_spec, mo_spec]
    else:
        out_shape = jax.ShapeDtypeStruct((B, Mo, Cout), out_dtype)
        out_specs = mo_spec

    return pl.pallas_call(
        kernel,
        out_shape=out_shape,
        grid_spec=pltpu.PrefetchScalarGridSpec(
            num_scalar_prefetch=0,
            grid=(B, n_tiles),
            in_specs=in_specs,
            out_specs=out_specs),
        compiler_params=pltpu.CompilerParams(
            dimension_semantics=("parallel", "parallel")),
    )(*args)


# ---------------------------------------------------------------------------
# _EncoderBlock2D forward (NCHW in / NCHW out, matching the PyTorch module)
# ---------------------------------------------------------------------------
def encoder_block_2d_forward(p, x_nchw, dsample, pool_kernal=2):
    x_f32 = jnp.transpose(x_nchw, (0, 2, 3, 1)).astype(jnp.float32)   # NHWC
    B, H, W, Cin = x_f32.shape
    Cout = p['conv1'].shape[-1]
    stride = pool_kernal if dsample else 1
    Ho = (H + 2 - 3) // stride + 1
    Wo = (W + 2 - 3) // stride + 1

    if dsample:
        # conv1+bn1+relu AND bn_ds(ds_conv) in one kernel (two outputs).
        y1, res = fused_conv3x3_bn(x_f32, p['conv1'], p['bn1'], stride=stride,
                                   ds_w=p['ds_conv'], ds_bn=p['bn_ds'],
                                   out_dtype=jnp.bfloat16)
    else:
        assert Cin == Cout, "identity residual requires matching channels"
        y1 = fused_conv3x3_bn(x_f32, p['conv1'], p['bn1'], stride=1,
                              out_dtype=jnp.bfloat16)
        res = x_f32.reshape(B, H * W, Cin)        # float32 identity residual

    # conv2 + bn2 + residual add + relu, fused.
    out = fused_conv3x3_bn(y1.reshape(B, Ho, Wo, Cout), p['conv2'], p['bn2'],
                           stride=1, residual=res, out_dtype=jnp.float32)
    out = out.reshape(B, Ho, Wo, Cout)
    return jnp.transpose(out, (0, 3, 1, 2))       # back to NCHW (module contract)


# ---------------------------------------------------------------------------
# Parameter init (kaiming conv weights, inference-mode BN folded to scale/shift)
# ---------------------------------------------------------------------------
def init_encoder_block_params(key, cin, cout, dsample):
    it = iter(jax.random.split(key, 16))

    def conv_w(kh, kw, ci, co):
        fan_in = ci * kh * kw
        return (jax.random.normal(next(it), (kh, kw, ci, co), jnp.float32)
                * np.sqrt(2.0 / fan_in))

    def bn(c):
        gamma = 1.0 + 0.1 * jax.random.normal(next(it), (c,), jnp.float32)
        beta = 0.1 * jax.random.normal(next(it), (c,), jnp.float32)
        mean = 0.1 * jax.random.normal(next(it), (c,), jnp.float32)
        var = jnp.ones((c,), jnp.float32)
        scale = gamma / jnp.sqrt(var + BN_EPS)
        shift = beta - mean * scale
        return {'scale': scale, 'shift': shift}

    p = {'conv1': conv_w(3, 3, cin, cout), 'bn1': bn(cout),
         'conv2': conv_w(3, 3, cout, cout), 'bn2': bn(cout)}
    if dsample:
        p['ds_conv'] = conv_w(1, 1, cin, cout)
        p['bn_ds'] = bn(cout)
    return p


# ---------------------------------------------------------------------------
# Pure-JAX reference (lax conv, same bf16 operand rounding) for validation
# ---------------------------------------------------------------------------
def encoder_block_2d_reference(p, x_nchw, dsample, pool_kernal=2):
    stride = pool_kernal if dsample else 1

    def conv(v, w, s, pad):
        return lax.conv_general_dilated(
            v.astype(jnp.bfloat16), w.astype(jnp.bfloat16),
            window_strides=(s, s), padding=[(pad, pad), (pad, pad)],
            dimension_numbers=('NCHW', 'HWIO', 'NCHW'),
            preferred_element_type=jnp.float32)

    def bn(v, b):
        return v * b['scale'][None, :, None, None] + b['shift'][None, :, None, None]

    out = jnp.maximum(bn(conv(x_nchw, p['conv1'], stride, 1), p['bn1']), 0.0)
    out = bn(conv(out, p['conv2'], 1, 1), p['bn2'])
    if dsample:
        res = bn(conv(x_nchw, p['ds_conv'], stride, 0), p['bn_ds'])
    else:
        res = x_nchw.astype(jnp.float32)
    return jnp.maximum(out + res, 0.0)


# ---------------------------------------------------------------------------
if __name__ == "__main__":
    key = jax.random.PRNGKey(0)
    kx, k1, k2 = jax.random.split(key, 3)

    Bn, Cin, H, W = 2, 4, 16, 16
    Cout = 8
    x = jax.random.normal(kx, (Bn, Cin, H, W), jnp.float32)

    # _EncoderBlock2D(4, 8, dsample=True, pool_kernal=2): strided + 1x1 downsample
    p_ds = init_encoder_block_params(k1, Cin, Cout, dsample=True)
    y_ds = encoder_block_2d_forward(p_ds, x, dsample=True, pool_kernal=2)

    # _EncoderBlock2D(8, 8, dsample=False): identity residual
    p_id = init_encoder_block_params(k2, Cout, Cout, dsample=False)
    y_id = encoder_block_2d_forward(p_id, y_ds, dsample=False)

    y_ds, y_id = jax.block_until_ready((y_ds, y_id))

    assert y_ds.shape == (Bn, Cout, H // 2, W // 2)
    assert y_id.shape == (Bn, Cout, H // 2, W // 2)
    assert bool(jnp.all(jnp.isfinite(y_ds)))
    assert bool(jnp.all(jnp.isfinite(y_id)))
    assert bool(jnp.all(y_id >= 0.0))           # block output ends in a ReLU

    # validate against the pure-JAX reference (bf16 MXU operands -> loose tol)
    r_ds = encoder_block_2d_reference(p_ds, x, dsample=True, pool_kernal=2)
    r_id = encoder_block_2d_reference(p_id, y_ds, dsample=False)
    for got, ref in ((y_ds, r_ds), (y_id, r_id)):
        rel = jnp.max(jnp.abs(got - ref)) / (jnp.max(jnp.abs(ref)) + 1e-6)
        assert float(rel) < 5e-2, f"mismatch vs reference: {float(rel)}"

    print("KERNEL_OK")
</pallas_src>

<mosaic_0001>
module attributes {stable_mosaic.version = 11 : i64} {
  func.func @kernel(%arg0: i32, %arg1: i32, %arg2: memref<1x36x9x4xbf16, #tpu.memory_space<vmem>>, %arg3: memref<9x4x8xbf16, #tpu.memory_space<vmem>>, %arg4: memref<1x8xf32, #tpu.memory_space<vmem>>, %arg5: memref<1x8xf32, #tpu.memory_space<vmem>>, %arg6: memref<4x8xbf16, #tpu.memory_space<vmem>>, %arg7: memref<1x8xf32, #tpu.memory_space<vmem>>, %arg8: memref<1x8xf32, #tpu.memory_space<vmem>>, %arg9: memref<1x64x8xbf16, #tpu.memory_space<vmem>>, %arg10: memref<1x64x8xf32, #tpu.memory_space<vmem>>) attributes {dimension_semantics = [#tpu.dimension_semantics<parallel>, #tpu.dimension_semantics<parallel>], iteration_bounds = array<i64: 2, 1>, scalar_prefetch = 0 : i64, scratch_operands = 0 : i64, tpu.core_type = #tpu.core_type<tc>, window_params = [{transform_indices = @transform_0, window_bounds = array<i64: 1, 36, 9, 4>}, {transform_indices = @transform_1, window_bounds = array<i64: 9, 4, 8>}, {transform_indices = @transform_2, window_bounds = array<i64: 1, 8>}, {transform_indices = @transform_3, window_bounds = array<i64: 1, 8>}, {transform_indices = @transform_4, window_bounds = array<i64: 4, 8>}, {transform_indices = @transform_5, window_bounds = array<i64: 1, 8>}, {transform_indices = @transform_6, window_bounds = array<i64: 1, 8>}, {transform_indices = @transform_7, window_bounds = array<i64: 1, 64, 8>}, {transform_indices = @transform_8, window_bounds = array<i64: 1, 64, 8>}]} {
    %cst = arith.constant 0.000000e+00 : f32
    %0 = vector.broadcast %cst : f32 to vector<64x8xf32>
    %c0 = arith.constant 0 : index
    %c0_0 = arith.constant 0 : index
    %c0_1 = arith.constant 0 : index
    %c0_2 = arith.constant 0 : index
    %1 = vector.load %arg2[%c0, %c0_0, %c0_1, %c0_2] : memref<1x36x9x4xbf16, #tpu.memory_space<vmem>>, vector<1x8x8x4xbf16>
    %2 = vector.shape_cast %1 : vector<1x8x8x4xbf16> to vector<8x8x4xbf16>
    %3 = vector.shape_cast %2 : vector<8x8x4xbf16> to vector<64x4xbf16>
    %c0_3 = arith.constant 0 : index
    %c0_4 = arith.constant 0 : index
    %c0_5 = arith.constant 0 : index
    %4 = vector.load %arg3[%c0_3, %c0_4, %c0_5] : memref<9x4x8xbf16, #tpu.memory_space<vmem>>, vector<1x4x8xbf16>
    %5 = vector.shape_cast %4 : vector<1x4x8xbf16> to vector<4x8xbf16>
    %cst_6 = arith.constant dense<0.000000e+00> : vector<64x8xf32>
    %6 = tpu.matmul %3, %5, %cst_6 {dimension_numbers = #tpu.dot_dimension_numbers<[1], [0], [0], [1], [0, 0, 1, 1], [], []>} : vector<64x4xbf16>, vector<4x8xbf16>, vector<64x8xf32> -> vector<64x8xf32>
    %7 = arith.addf %0, %6 : vector<64x8xf32>
    %c0_7 = arith.constant 0 : index
    %c9 = arith.constant 9 : index
    %c0_8 = arith.constant 0 : index
    %c0_9 = arith.constant 0 : index
    %8 = vector.load %arg2[%c0_7, %c9, %c0_8, %c0_9] : memref<1x36x9x4xbf16, #tpu.memory_space<vmem>>, vector<1x8x8x4xbf16>
    %9 = vector.shape_cast %8 : vector<1x8x8x4xbf16> to vector<8x8x4xbf16>
    %10 = vector.shape_cast %9 : vector<8x8x4xbf16> to vector<64x4xbf16>
    %c1 = arith.constant 1 : index
    %c0_10 = arith.constant 0 : index
    %c0_11 = arith.constant 0 : index
    %11 = vector.load %arg3[%c1, %c0_10, %c0_11] : memref<9x4x8xbf16, #tpu.memory_space<vmem>>, vector<1x4x8xbf16>
    %12 = vector.shape_cast %11 : vector<1x4x8xbf16> to vector<4x8xbf16>
    %cst_12 = arith.constant dense<0.000000e+00> : vector<64x8xf32>
    %13 = tpu.matmul %10, %12, %cst_12 {dimension_numbers = #tpu.dot_dimension_numbers<[1], [0], [0], [1], [0, 0, 1, 1], [], []>} : vector<64x4xbf16>, vector<4x8xbf16>, vector<64x8xf32> -> vector<64x8xf32>
    %14 = arith.addf %7, %13 : vector<64x8xf32>
    %c0_13 = arith.constant 0 : index
    %c0_14 = arith.constant 0 : index
    %c1_15 = arith.constant 1 : index
    %c0_16 = arith.constant 0 : index
    %15 = vector.load %arg2[%c0_13, %c0_14, %c1_15, %c0_16] : memref<1x36x9x4xbf16, #tpu.memory_space<vmem>>, vector<1x8x8x4xbf16>
    %16 = vector.shape_cast %15 : vector<1x8x8x4xbf16> to vector<8x8x4xbf16>
    %17 = vector.shape_cast %16 : vector<8x8x4xbf16> to vector<64x4xbf16>
    %c2 = arith.constant 2 : index
    %c0_17 = arith.constant 0 : index
    %c0_18 = arith.constant 0 : index
    %18 = vector.load %arg3[%c2, %c0_17, %c0_18] : memref<9x4x8xbf16, #tpu.memory_space<vmem>>, vector<1x4x8xbf16>
    %19 = vector.shape_cast %18 : vector<1x4x8xbf16> to vector<4x8xbf16>
    %cst_19 = arith.constant dense<0.000000e+00> : vector<64x8xf32>
    %20 = tpu.matmul %17, %19, %cst_19 {dimension_numbers = #tpu.dot_dimension_numbers<[1], [0], [0], [1], [0, 0, 1, 1], [], []>} : vector<64x4xbf16>, vector<4x8xbf16>, vector<64x8xf32> -> vector<64x8xf32>
    %21 = arith.addf %14, %20 : vector<64x8xf32>
    %c0_20 = arith.constant 0 : index
    %c18 = arith.constant 18 : index
    %c0_21 = arith.constant 0 : index
    %c0_22 = arith.constant 0 : index
    %22 = vector.load %arg2[%c0_20, %c18, %c0_21, %c0_22] : memref<1x36x9x4xbf16, #tpu.memory_space<vmem>>, vector<1x8x8x4xbf16>
    %23 = vector.shape_cast %22 : vector<1x8x8x4xbf16> to vector<8x8x4xbf16>
    %24 = vector.shape_cast %23 : vector<8x8x4xbf16> to vector<64x4xbf16>
    %c3 = arith.constant 3 : index
    %c0_23 = arith.constant 0 : index
    %c0_24 = arith.constant 0 : index
    %25 = vector.load %arg3[%c3, %c0_23, %c0_24] : memref<9x4x8xbf16, #tpu.memory_space<vmem>>, vector<1x4x8xbf16>
    %26 = vector.shape_cast %25 : vector<1x4x8xbf16> to vector<4x8xbf16>
    %cst_25 = arith.constant dense<0.000000e+00> : vector<64x8xf32>
    %27 = tpu.matmul %24, %26, %cst_25 {dimension_numbers = #tpu.dot_dimension_numbers<[1], [0], [0], [1], [0, 0, 1, 1], [], []>} : vector<64x4xbf16>, vector<4x8xbf16>, vector<64x8xf32> -> vector<64x8xf32>
    %28 = arith.addf %21, %27 : vector<64x8xf32>
    %c0_26 = arith.constant 0 : index
    %c27 = arith.constant 27 : index
    %c0_27 = arith.constant 0 : index
    %c0_28 = arith.constant 0 : index
    %29 = vector.load %arg2[%c0_26, %c27, %c0_27, %c0_28] : memref<1x36x9x4xbf16, #tpu.memory_space<vmem>>, vector<1x8x8x4xbf16>
    %30 = vector.shape_cast %29 : vector<1x8x8x4xbf16> to vector<8x8x4xbf16>
    %31 = vector.shape_cast %30 : vector<8x8x4xbf16> to vector<64x4xbf16>
    %c4 = arith.constant 4 : index
    %c0_29 = arith.constant 0 : index
    %c0_30 = arith.constant 0 : index
    %32 = vector.load %arg3[%c4, %c0_29, %c0_30] : memref<9x4x8xbf16, #tpu.memory_space<vmem>>, vector<1x4x8xbf16>
    %33 = vector.shape_cast %32 : vector<1x4x8xbf16> to vector<4x8xbf16>
    %cst_31 = arith.constant dense<0.000000e+00> : vector<64x8xf32>
    %34 = tpu.matmul %31, %33, %cst_31 {dimension_numbers = #tpu.dot_dimension_numbers<[1], [0], [0], [1], [0, 0, 1, 1], [], []>} : vector<64x4xbf16>, vector<4x8xbf16>, vector<64x8xf32> -> vector<64x8xf32>
    %35 = arith.addf %28, %34 : vector<64x8xf32>
    %c0_32 = arith.constant 0 : index
    %c0_33 = arith.constant 0 : index
    %36 = vector.load %arg6[%c0_32, %c0_33] : memref<4x8xbf16, #tpu.memory_space<vmem>>, vector<4x8xbf16>
    %cst_34 = arith.constant dense<0.000000e+00> : vector<64x8xf32>
    %37 = tpu.matmul %31, %36, %cst_34 {dimension_numbers = #tpu.dot_dimension_numbers<[1], [0], [0], [1], [0, 0, 1, 1], [], []>} : vector<64x4xbf16>, vector<4x8xbf16>, vector<64x8xf32> -> vector<64x8xf32>
    %c0_35 = arith.constant 0 : index
    %c0_36 = arith.constant 0 : index
    %38 = vector.load %arg7[%c0_35, %c0_36] : memref<1x8xf32, #tpu.memory_space<vmem>>, vector<1x8xf32>
    %39 = vector.broadcast %38 : vector<1x8xf32> to vector<64x8xf32>
    %40 = arith.mulf %37, %39 : vector<64x8xf32>
    %c0_37 = arith.constant 0 : index
    %c0_38 = arith.constant 0 : index
    %41 = vector.load %arg8[%c0_37, %c0_38] : memref<1x8xf32, #tpu.memory_space<vmem>>, vector<1x8xf32>
    %42 = vector.broadcast %41 : vector<1x8xf32> to vector<64x8xf32>
    %43 = arith.addf %40, %42 : vector<64x8xf32>
    %c0_39 = arith.constant 0 : index
    %c0_40 = arith.constant 0 : index
    %c0_41 = arith.constant 0 : index
    %44 = vector.load %arg10[%c0_39, %c0_40, %c0_41] : memref<1x64x8xf32, #tpu.memory_space<vmem>>, vector<1x64x8xf32>
    %45 = vector.shape_cast %44 : vector<1x64x8xf32> to vector<64x8xf32>
    %46 = vector.shape_cast %43 : vector<64x8xf32> to vector<1x64x8xf32>
    tpu.vector_store %arg10[%c0_39, %c0_40, %c0_41], %46 {strides = array<i32>} : memref<1x64x8xf32, #tpu.memory_space<vmem>>, vector<1x64x8xf32>,
    %c0_42 = arith.constant 0 : index
    %c18_43 = arith.constant 18 : index
    %c1_44 = arith.constant 1 : index
    %c0_45 = arith.constant 0 : index
    %47 = vector.load %arg2[%c0_42, %c18_43, %c1_44, %c0_45] : memref<1x36x9x4xbf16, #tpu.memory_space<vmem>>, vector<1x8x8x4xbf16>
    %48 = vector.shape_cast %47 : vector<1x8x8x4xbf16> to vector<8x8x4xbf16>
    %49 = vector.shape_cast %48 : vector<8x8x4xbf16> to vector<64x4xbf16>
    %c5 = arith.constant 5 : index
    %c0_46 = arith.constant 0 : index
    %c0_47 = arith.constant 0 : index
    %50 = vector.load %arg3[%c5, %c0_46, %c0_47] : memref<9x4x8xbf16, #tpu.memory_space<vmem>>, vector<1x4x8xbf16>
    %51 = vector.shape_cast %50 : vector<1x4x8xbf16> to vector<4x8xbf16>
    %cst_48 = arith.constant dense<0.000000e+00> : vector<64x8xf32>
    %52 = tpu.matmul %49, %51, %cst_48 {dimension_numbers = #tpu.dot_dimension_numbers<[1], [0], [0], [1], [0, 0, 1, 1], [], []>} : vector<64x4xbf16>, vector<4x8xbf16>, vector<64x8xf32> -> vector<64x8xf32>
    %53 = arith.addf %35, %52 : vector<64x8xf32>
    %c0_49 = arith.constant 0 : index
    %c1_50 = arith.constant 1 : index
    %c0_51 = arith.constant 0 : index
    %c0_52 = arith.constant 0 : index
    %54 = vector.load %arg2[%c0_49, %c1_50, %c0_51, %c0_52] : memref<1x36x9x4xbf16, #tpu.memory_space<vmem>>, vector<1x8x8x4xbf16>
    %55 = vector.shape_cast %54 : vector<1x8x8x4xbf16> to vector<8x8x4xbf16>
    %56 = vector.shape_cast %55 : vector<8x8x4xbf16> to vector<64x4xbf16>
    %c6 = arith.constant 6 : index
    %c0_53 = arith.constant 0 : index
    %c0_54 = arith.constant 0 : index
    %57 = vector.load %arg3[%c6, %c0_53, %c0_54] : memref<9x4x8xbf16, #tpu.memory_space<vmem>>, vector<1x4x8xbf16>
    %58 = vector.shape_cast %57 : vector<1x4x8xbf16> to vector<4x8xbf16>
    %cst_55 = arith.constant dense<0.000000e+00> : vector<64x8xf32>
    %59 = tpu.matmul %56, %58, %cst_55 {dimension_numbers = #tpu.dot_dimension_numbers<[1], [0], [0], [1], [0, 0, 1, 1], [], []>} : vector<64x4xbf16>, vector<4x8xbf16>, vector<64x8xf32> -> vector<64x8xf32>
    %60 = arith.addf %53, %59 : vector<64x8xf32>
    %c0_56 = arith.constant 0 : index
    %c10 = arith.constant 10 : index
    %c0_57 = arith.constant 0 : index
    %c0_58 = arith.constant 0 : index
    %61 = vector.load %arg2[%c0_56, %c10, %c0_57, %c0_58] : memref<1x36x9x4xbf16, #tpu.memory_space<vmem>>, vector<1x8x8x4xbf16>
    %62 = vector.shape_cast %61 : vector<1x8x8x4xbf16> to vector<8x8x4xbf16>
    %63 = vector.shape_cast %62 : vector<8x8x4xbf16> to vector<64x4xbf16>
    %c7 = arith.constant 7 : index
    %c0_59 = arith.constant 0 : index
    %c0_60 = arith.constant 0 : index
    %64 = vector.load %arg3[%c7, %c0_59, %c0_60] : memref<9x4x8xbf16, #tpu.memory_space<vmem>>, vector<1x4x8xbf16>
    %65 = vector.shape_cast %64 : vector<1x4x8xbf16> to vector<4x8xbf16>
    %cst_61 = arith.constant dense<0.000000e+00> : vector<64x8xf32>
    %66 = tpu.matmul %63, %65, %cst_61 {dimension_numbers = #tpu.dot_dimension_numbers<[1], [0], [0], [1], [0, 0, 1, 1], [], []>} : vector<64x4xbf16>, vector<4x8xbf16>, vector<64x8xf32> -> vector<64x8xf32>
    %67 = arith.addf %60, %66 : vector<64x8xf32>
    %c0_62 = arith.constant 0 : index
    %c1_63 = arith.constant 1 : index
    %c1_64 = arith.constant 1 : index
    %c0_65 = arith.constant 0 : index
    %68 = vector.load %arg2[%c0_62, %c1_63, %c1_64, %c0_65] : memref<1x36x9x4xbf16, #tpu.memory_space<vmem>>, vector<1x8x8x4xbf16>
    %69 = vector.shape_cast %68 : vector<1x8x8x4xbf16> to vector<8x8x4xbf16>
    %70 = vector.shape_cast %69 : vector<8x8x4xbf16> to vector<64x4xbf16>
    %c8 = arith.constant 8 : index
    %c0_66 = arith.constant 0 : index
    %c0_67 = arith.constant 0 : index
    %71 = vector.load %arg3[%c8, %c0_66, %c0_67] : memref<9x4x8xbf16, #tpu.memory_space<vmem>>, vector<1x4x8xbf16>
    %72 = vector.shape_cast %71 : vector<1x4x8xbf16> to vector<4x8xbf16>
    %cst_68 = arith.constant dense<0.000000e+00> : vector<64x8xf32>
    %73 = tpu.matmul %70, %72, %cst_68 {dimension_numbers = #tpu.dot_dimension_numbers<[1], [0], [0], [1], [0, 0, 1, 1], [], []>} : vector<64x4xbf16>, vector<4x8xbf16>, vector<64x8xf32> -> vector<64x8xf32>
    %74 = arith.addf %67, %73 : vector<64x8xf32>
    %c0_69 = arith.constant 0 : index
    %c0_70 = arith.constant 0 : index
    %75 = vector.load %arg4[%c0_69, %c0_70] : memref<1x8xf32, #tpu.memory_space<vmem>>, vector<1x8xf32>
    %76 = vector.broadcast %75 : vector<1x8xf32> to vector<64x8xf32>
    %77 = arith.mulf %74, %76 : vector<64x8xf32>
    %c0_71 = arith.constant 0 : index
    %c0_72 = arith.constant 0 : index
    %78 = vector.load %arg5[%c0_71, %c0_72] : memref<1x8xf32, #tpu.memory_space<vmem>>, vector<1x8xf32>
    %79 = vector.broadcast %78 : vector<1x8xf32> to vector<64x8xf32>
    %80 = arith.addf %77, %79 : vector<64x8xf32>
    %cst_73 = arith.constant 0.000000e+00 : f32
    %81 = vector.broadcast %cst_73 : f32 to vector<64x8xf32>
    %82 = arith.maximumf %80, %81 : vector<64x8xf32>
    %83 = arith.truncf %82 : vector<64x8xf32> to vector<64x8xbf16>
    %c0_74 = arith.constant 0 : index
    %c0_75 = arith.constant 0 : index
    %c0_76 = arith.constant 0 : index
    %84 = vector.load %arg9[%c0_74, %c0_75, %c0_76] : memref<1x64x8xbf16, #tpu.memory_space<vmem>>, vector<1x64x8xbf16>
    %85 = vector.shape_cast %84 : vector<1x64x8xbf16> to vector<64x8xbf16>
    %86 = vector.shape_cast %83 : vector<64x8xbf16> to vector<1x64x8xbf16>
    tpu.vector_store %arg9[%c0_74, %c0_75, %c0_76], %86 {strides = array<i32>} : memref<1x64x8xbf16, #tpu.memory_space<vmem>>, vector<1x64x8xbf16>,
    return
  }
  func.func @transform_0(%arg0: i32, %arg1: i32) -> (i32, i32, i32, i32) {
    %c0_i32 = arith.constant 0 : i32
    %c0_i32_0 = arith.constant 0 : i32
    %c0_i32_1 = arith.constant 0 : i32
    %c0_i32_2 = arith.constant 0 : i32
    return %arg0, %c0_i32, %c0_i32_0, %c0_i32_1 : i32, i32, i32, i32
  }
  func.func @transform_1(%arg0: i32, %arg1: i32) -> (i32, i32, i32) {
    %c0_i32 = arith.constant 0 : i32
    %c0_i32_0 = arith.constant 0 : i32
    %c0_i32_1 = arith.constant 0 : i32
    return %c0_i32, %c0_i32_0, %arg1 : i32, i32, i32
  }
  func.func @transform_2(%arg0: i32, %arg1: i32) -> (i32, i32) {
    %c0_i32 = arith.constant 0 : i32
    %c0_i32_0 = arith.constant 0 : i32
    return %c0_i32, %arg1 : i32, i32
  }
  func.func @transform_3(%arg0: i32, %arg1: i32) -> (i32, i32) {
    %c0_i32 = arith.constant 0 : i32
    %c0_i32_0 = arith.constant 0 : i32
    return %c0_i32, %arg1 : i32, i32
  }
  func.func @transform_4(%arg0: i32, %arg1: i32) -> (i32, i32) {
    %c0_i32 = arith.constant 0 : i32
    %c0_i32_0 = arith.constant 0 : i32
    return %c0_i32, %arg1 : i32, i32
  }
  func.func @transform_5(%arg0: i32, %arg1: i32) -> (i32, i32) {
    %c0_i32 = arith.constant 0 : i32
    %c0_i32_0 = arith.constant 0 : i32
    return %c0_i32, %arg1 : i32, i32
  }
  func.func @transform_6(%arg0: i32, %arg1: i32) -> (i32, i32) {
    %c0_i32 = arith.constant 0 : i32
    %c0_i32_0 = arith.constant 0 : i32
    return %c0_i32, %arg1 : i32, i32
  }
  func.func @transform_7(%arg0: i32, %arg1: i32) -> (i32, i32, i32) {
    %c0_i32 = arith.constant 0 : i32
    %c0_i32_0 = arith.constant 0 : i32
    return %arg0, %c0_i32, %arg1 : i32, i32, i32
  }
  func.func @transform_8(%arg0: i32, %arg1: i32) -> (i32, i32, i32) {
    %c0_i32 = arith.constant 0 : i32
    %c0_i32_0 = arith.constant 0 : i32
    return %arg0, %c0_i32, %arg1 : i32, i32, i32
  }
}

</mosaic_0001>

<llo_original>
// kernel: tpu_custom_call.1
$region0: #{tpu_custom_call.1}
  #allocation0 [shape = 'u32[]', space=smem, size = 0x4, offset = 0x4, fixed_abs, tag = 'smem constant byte address 0x4 - core index']
  #allocation1 [shape = 'u32[144,128]{1,0:T(1,128)}', space=vmem, size = 0x12000, scoped, tag = 'internal scratch']
  %s0 = inlined_call_operand.vmem [shape: bf16[2,36,9,4], index: 0, kind: input, shape index: {}]
  %s1 = inlined_call_operand.vmem [shape: bf16[9,4,8], index: 1, kind: input, shape index: {}]
  %s2 = inlined_call_operand.vmem [shape: f32[1,8], index: 2, kind: input, shape index: {}]
  %s3 = inlined_call_operand.vmem [shape: f32[1,8], index: 3, kind: input, shape index: {}]
  %s4 = inlined_call_operand.vmem [shape: bf16[4,8], index: 4, kind: input, shape index: {}]
  %s5 = inlined_call_operand.vmem [shape: f32[1,8], index: 5, kind: input, shape index: {}]
  %s6 = inlined_call_operand.vmem [shape: f32[1,8], index: 6, kind: input, shape index: {}]
  %s7 = inlined_call_operand.vmem [shape: bf16[2,64,8], index: 7, kind: output, shape index: {0}]
  %s8 = inlined_call_operand.vmem [shape: f32[2,64,8], index: 8, kind: output, shape index: {1}]
  %9 = xla_tuple %s7, %s8
  %s10 = sld [smem:[#allocation0]]
  $region69: #{tpu_custom_call.1} parent=0
    _
  %s12 = ssub.s32 1, %s10
  %s13 = scalar_select 0, %s12, %s10
  loop: start=0, step=1, limit=4
  $region2: #{tpu_custom_call.1} parent=0 // loop_pre_header
    _
  $region3: #{tpu_custom_call.1} parent=0 // loop_header
    %s15 = sphi 0, %s19
    %p16 = scmp.ge.s32.totalorder %s15, 4
    %s22 = sphi 0, %s34
    %s23 = sphi 0, %s30
    %s24 = sphi 0, %s22
    %s25 = sphi 0, %s23
    %s26 = sphi 0, %s24
    %s27 = sphi 0, %s25
    %s37 = sphi 0, %s39
    %s40 = sphi 0, %s37
    %s41 = sphi 0, %s40
    %s57 = sphi 0, %s41
    %s63 = sphi 0, %s65
    %s66 = sphi 0, %s63
    %s67 = sphi 0, %s66
    %s83 = sphi 0, %s67
    %s89 = sphi 0, %s91
    %s92 = sphi 0, %s89
    %s93 = sphi 0, %s92
    %s109 = sphi 0, %s93
    %s115 = sphi 0, %s117
    %s118 = sphi 0, %s115
    %s119 = sphi 0, %s118
    %s135 = sphi 0, %s119
    %s141 = sphi 0, %s143
    %s144 = sphi 0, %s141
    %s145 = sphi 0, %s144
    %s161 = sphi 0, %s145
    %s167 = sphi 0, %s169
    %s170 = sphi 0, %s167
    %s171 = sphi 0, %s170
    %s187 = sphi 0, %s171
    %s193 = sphi 0, %s195
    %s196 = sphi 0, %s193
    %s197 = sphi 0, %s196
    %s213 = sphi 0, %s197
    %s221 = sphi 0, %s223
    %s224 = sphi 0, %s221
    %s225 = sphi 0, %s224
    %s241 = sphi 0, %s225
    %s249 = sphi 0, %s251
    %s252 = sphi 0, %s249
    %s253 = sphi 0, %s252
    %s269 = sphi 0, %s253
  $region4: #{tpu_custom_call.1} parent=0 // loop_header_branch
    %18 = sbr.rel (%p16) target = $region8
  $region5: #{tpu_custom_call.1} parent=0 // loop_body
    %s20 = ssub.s32 %s15, 1
    %s21 = ssub.s32 %s15, 2
    %s28 = sadd.s32 1, %s23
    %p29 = scmp.ge.s32.totalorder %s28, 1
    %s30 = scalar_select %p29, 0, %s28
    %s31 = sadd.s32 1, %s22
    %s32 = scalar_select %p29, %s31, %s22
    %p33 = scmp.ge.s32.totalorder %s32, 2
    %s34 = scalar_select %p33, 0, %s32
    %s35 = ssub.s32 %s22, %s34
    %p36 = scmp.eq.s32.totalorder %s35, 0
    %s38 = sadd.s32 %s37, 1
    %s39 = scalar_select %p36, %s37, %s38
    %p42 = pneg %p36
    %p43 = scmp.eq.s32.totalorder %s15, 1
    %p44 = por %p42, %p43
    %p45 = scmp.ne.s32.totalorder %s37, %s40
    %p46 = scmp.eq.s32.totalorder %s15, 0
    %p47 = por %p45, %p46
    %p48 = scmp.ne.s32.totalorder %s37, %s40
    %p49 = scmp.eq.s32.totalorder %s20, 1
    %p50 = por %p48, %p49
    %p51 = scmp.ne.s32.totalorder %s40, %s41
    %p52 = scmp.eq.s32.totalorder %s20, 0
    %p53 = por %p51, %p52
    %p54 = scmp.ne.s32.totalorder %s40, %s41
    %p55 = scmp.eq.s32.totalorder %s21, 1
    %p56 = por %p54, %p55
    %p58 = scmp.ne.s32.totalorder %s41, %s57
    %p59 = scmp.eq.s32.totalorder %s21, 0
    %p60 = por %p58, %p59
    %s61 = ssub.s32 %s23, %s30
    %p62 = scmp.eq.s32.totalorder %s61, 0
    %s64 = sadd.s32 %s63, 1
    %s65 = scalar_select %p62, %s63, %s64
    %p68 = pneg %p62
    %p69 = scmp.eq.s32.totalorder %s15, 1
    %p70 = por %p68, %p69
    %p71 = scmp.ne.s32.totalorder %s63, %s66
    %p72 = scmp.eq.s32.totalorder %s15, 0
    %p73 = por %p71, %p72
    %p74 = scmp.ne.s32.totalorder %s63, %s66
    %p75 = scmp.eq.s32.totalorder %s20, 1
    %p76 = por %p74, %p75
    %p77 = scmp.ne.s32.totalorder %s66, %s67
    %p78 = scmp.eq.s32.totalorder %s20, 0
    %p79 = por %p77, %p78
    %p80 = scmp.ne.s32.totalorder %s66, %s67
    %p81 = scmp.eq.s32.totalorder %s21, 1
    %p82 = por %p80, %p81
    %p84 = scmp.ne.s32.totalorder %s67, %s83
    %p85 = scmp.eq.s32.totalorder %s21, 0
    %p86 = por %p84, %p85
    %s87 = ssub.s32 %s23, %s30
    %p88 = scmp.eq.s32.totalorder %s87, 0
    %s90 = sadd.s32 %s89, 1
    %s91 = scalar_select %p88, %s89, %s90
    %p94 = pneg %p88
    %p95 = scmp.eq.s32.totalorder %s15, 1
    %p96 = por %p94, %p95
    %p97 = scmp.ne.s32.totalorder %s89, %s92
    %p98 = scmp.eq.s32.totalorder %s15, 0
    %p99 = por %p97, %p98
    %p100 = scmp.ne.s32.totalorder %s89, %s92
    %p101 = scmp.eq.s32.totalorder %s20, 1
    %p102 = por %p100, %p101
    %p103 = scmp.ne.s32.totalorder %s92, %s93
    %p104 = scmp.eq.s32.totalorder %s20, 0
    %p105 = por %p103, %p104
    %p106 = scmp.ne.s32.totalorder %s92, %s93
    %p107 = scmp.eq.s32.totalorder %s21, 1
    %p108 = por %p106, %p107
    %p110 = scmp.ne.s32.totalorder %s93, %s109
    %p111 = scmp.eq.s32.totalorder %s21, 0
    %p112 = por %p110, %p111
    %s113 = ssub.s32 %s23, %s30
    %p114 = scmp.eq.s32.totalorder %s113, 0
    %s116 = sadd.s32 %s115, 1
    %s117 = scalar_select %p114, %s115, %s116
    %p120 = pneg %p114
    %p121 = scmp.eq.s32.totalorder %s15, 1
    %p122 = por %p120, %p121
    %p123 = scmp.ne.s32.totalorder %s115, %s118
    %p124 = scmp.eq.s32.totalorder %s15, 0
    %p125 = por %p123, %p124
    %p126 = scmp.ne.s32.totalorder %s115, %s118
    %p127 = scmp.eq.s32.totalorder %s20, 1
    %p128 = por %p126, %p127
    %p129 = scmp.ne.s32.totalorder %s118, %s119
    %p130 = scmp.eq.s32.totalorder %s20, 0
    %p131 = por %p129, %p130
    %p132 = scmp.ne.s32.totalorder %s118, %s119
    %p133 = scmp.eq.s32.totalorder %s21, 1
    %p134 = por %p132, %p133
    %p136 = scmp.ne.s32.totalorder %s119, %s135
    %p137 = scmp.eq.s32.totalorder %s21, 0
    %p138 = por %p136, %p137
    %s139 = ssub.s32 %s23, %s30
    %p140 = scmp.eq.s32.totalorder %s139, 0
    %s142 = sadd.s32 %s141, 1
    %s143 = scalar_select %p140, %s141, %s142
    %p146 = pneg %p140
    %p147 = scmp.eq.s32.totalorder %s15, 1
    %p148 = por %p146, %p147
    %p149 = scmp.ne.s32.totalorder %s141, %s144
    %p150 = scmp.eq.s32.totalorder %s15, 0
    %p151 = por %p149, %p150
    %p152 = scmp.ne.s32.totalorder %s141, %s144
    %p153 = scmp.eq.s32.totalorder %s20, 1
    %p154 = por %p152, %p153
    %p155 = scmp.ne.s32.totalorder %s144, %s145
    %p156 = scmp.eq.s32.totalorder %s20, 0
    %p157 = por %p155, %p156
    %p158 = scmp.ne.s32.totalorder %s144, %s145
    %p159 = scmp.eq.s32.totalorder %s21, 1
    %p160 = por %p158, %p159
    %p162 = scmp.ne.s32.totalorder %s145, %s161
    %p163 = scmp.eq.s32.totalorder %s21, 0
    %p164 = por %p162, %p163
    %s165 = ssub.s32 %s23, %s30
    %p166 = scmp.eq.s32.totalorder %s165, 0
    %s168 = sadd.s32 %s167, 1
    %s169 = scalar_select %p166, %s167, %s168
    %p172 = pneg %p166
    %p173 = scmp.eq.s32.totalorder %s15, 1
    %p174 = por %p172, %p173
    %p175 = scmp.ne.s32.totalorder %s167, %s170
    %p176 = scmp.eq.s32.totalorder %s15, 0
    %p177 = por %p175, %p176
    %p178 = scmp.ne.s32.totalorder %s167, %s170
    %p179 = scmp.eq.s32.totalorder %s20, 1
    %p180 = por %p178, %p179
    %p181 = scmp.ne.s32.totalorder %s170, %s171
    %p182 = scmp.eq.s32.totalorder %s20, 0
    %p183 = por %p181, %p182
    %p184 = scmp.ne.s32.totalorder %s170, %s171
    %p185 = scmp.eq.s32.totalorder %s21, 1
    %p186 = por %p184, %p185
    %p188 = scmp.ne.s32.totalorder %s171, %s187
    %p189 = scmp.eq.s32.totalorder %s21, 0
    %p190 = por %p188, %p189
    %s191 = ssub.s32 %s23, %s30
    %p192 = scmp.eq.s32.totalorder %s191, 0
    %s194 = sadd.s32 %s193, 1
    %s195 = scalar_select %p192, %s193, %s194
    %p198 = pneg %p192
    %p199 = scmp.eq.s32.totalorder %s15, 1
    %p200 = por %p198, %p199
    %p201 = scmp.ne.s32.totalorder %s193, %s196
    %p202 = scmp.eq.s32.totalorder %s15, 0
    %p203 = por %p201, %p202
    %p204 = scmp.ne.s32.totalorder %s193, %s196
    %p205 = scmp.eq.s32.totalorder %s20, 1
    %p206 = por %p204, %p205
    %p207 = scmp.ne.s32.totalorder %s196, %s197
    %p208 = scmp.eq.s32.totalorder %s20, 0
    %p209 = por %p207, %p208
    %p210 = scmp.ne.s32.totalorder %s196, %s197
    %p211 = scmp.eq.s32.totalorder %s21, 1
    %p212 = por %p210, %p211
    %p214 = scmp.ne.s32.totalorder %s197, %s213
    %p215 = scmp.eq.s32.totalorder %s21, 0
    %p216 = por %p214, %p215
    %s217 = ssub.s32 %s22, %s34
    %s218 = ssub.s32 %s23, %s30
    %s219 = sor.u32 %s217, %s218
    %p220 = scmp.eq.s32.totalorder %s219, 0
    %s222 = sadd.s32 %s221, 1
    %s223 = scalar_select %p220, %s221, %s222
    %p226 = pneg %p220
    %p227 = scmp.eq.s32.totalorder %s15, 1
    %p228 = por %p226, %p227
    %p229 = scmp.ne.s32.totalorder %s221, %s224
    %p230 = scmp.eq.s32.totalorder %s15, 0
    %p231 = por %p229, %p230
    %p232 = scmp.ne.s32.totalorder %s221, %s224
    %p233 = scmp.eq.s32.totalorder %s20, 1
    %p234 = por %p232, %p233
    %p235 = scmp.ne.s32.totalorder %s224, %s225
    %p236 = scmp.eq.s32.totalorder %s20, 0
    %p237 = por %p235, %p236
    %p238 = scmp.ne.s32.totalorder %s224, %s225
    %p239 = scmp.eq.s32.totalorder %s21, 1
    %p240 = por %p238, %p239
    %p242 = scmp.ne.s32.totalorder %s225, %s241
    %p243 = scmp.eq.s32.totalorder %s21, 0
    %p244 = por %p242, %p243
    %s245 = ssub.s32 %s22, %s34
    %s246 = ssub.s32 %s23, %s30
    %s247 = sor.u32 %s245, %s246
    %p248 = scmp.eq.s32.totalorder %s247, 0
    %s250 = sadd.s32 %s249, 1
    %s251 = scalar_select %p248, %s249, %s250
    %p254 = pneg %p248
    %p255 = scmp.eq.s32.totalorder %s15, 1
    %p256 = por %p254, %p255
    %p257 = scmp.ne.s32.totalorder %s249, %s252
    %p258 = scmp.eq.s32.totalorder %s15, 0
    %p259 = por %p257, %p258
    %p260 = scmp.ne.s32.totalorder %s249, %s252
    %p261 = scmp.eq.s32.totalorder %s20, 1
    %p262 = por %p260, %p261
    %p263 = scmp.ne.s32.totalorder %s252, %s253
    %p264 = scmp.eq.s32.totalorder %s20, 0
    %p265 = por %p263, %p264
    %p266 = scmp.ne.s32.totalorder %s252, %s253
    %p267 = scmp.eq.s32.totalorder %s21, 1
    %p268 = por %p266, %p267
    %p270 = scmp.ne.s32.totalorder %s253, %s269
    %p271 = scmp.eq.s32.totalorder %s21, 0
    %p272 = por %p270, %p271
    %p273 = scmp.le.s32.totalorder 1, %s15
    %p274 = scmp.lt.s32.totalorder %s15, 3
    %p275 = pnand %p273, %p274
    %p276 = pneg %p275
    // Predicated region
    $region9: #{tpu_custom_call.1} parent=5 // pred_check
      _
    $region10: #{tpu_custom_call.1} parent=5 // pred_check_branch
      %278 = sbr.rel (%p275) target = $region12
    $region11: #{tpu_custom_call.1} parent=5 // pred_region
      %s279 = ssub.s32 %s15, 1
      // Predicated region
      $region13: #{tpu_custom_call.1} parent=11 // pred_check
        %p280 = pneg %p79
      $region14: #{tpu_custom_call.1} parent=11 // pred_check_branch
        %282 = sbr.rel (%p280) target = $region16
      $region15: #{tpu_custom_call.1} parent=11 // pred_region
        %p283 = scmp.lt.s32.totalorder %s25, 0
        %s284 = scalar_select %p283, %s25, 0
        %s285 = smul.addr %s284, 2
        %s286 = scalar_lea.vmem %s1, %s285
      $region16: #{tpu_custom_call.1} parent=11 // pred_fallthru
        _
      // Predicated region
      $region17: #{tpu_custom_call.1} parent=11 // pred_check
        %p287 = pneg %p105
      $region18: #{tpu_custom_call.1} parent=11 // pred_check_branch
        %289 = sbr.rel (%p287) target = $region20
      $region19: #{tpu_custom_call.1} parent=11 // pred_region
        %p290 = scmp.lt.s32.totalorder %s25, 0
        %s291 = scalar_select %p290, %s25, 0
        %s292 = scalar_lea.vmem %s2, %s291
      $region20: #{tpu_custom_call.1} parent=11 // pred_fallthru
        _
      // Predicated region
      $region21: #{tpu_custom_call.1} parent=11 // pred_check
        %p293 = pneg %p131
      $region22: #{tpu_custom_call.1} parent=11 // pred_check_branch
        %295 = sbr.rel (%p293) target = $region24
      $region23: #{tpu_custom_call.1} parent=11 // pred_region
        %p296 = scmp.lt.s32.totalorder %s25, 0
        %s297 = scalar_select %p296, %s25, 0
        %s298 = scalar_lea.vmem %s3, %s297
      $region24: #{tpu_custom_call.1} parent=11 // pred_fallthru
        _
      // Predicated region
      $region25: #{tpu_custom_call.1} parent=11 // pred_check
        %p299 = pneg %p157
      $region26: #{tpu_custom_call.1} parent=11 // pred_check_branch
        %301 = sbr.rel (%p299) target = $region28
      $region27: #{tpu_custom_call.1} parent=11 // pred_region
        %p302 = scmp.lt.s32.totalorder %s25, 0
        %s303 = scalar_select %p302, %s25, 0
        %s304 = smul.addr %s303, 2
        %s305 = scalar_lea.vmem %s4, %s304
      $region28: #{tpu_custom_call.1} parent=11 // pred_fallthru
        _
      // Predicated region
      $region29: #{tpu_custom_call.1} parent=11 // pred_check
        %p306 = pneg %p183
      $region30: #{tpu_custom_call.1} parent=11 // pred_check_branch
        %308 = sbr.rel (%p306) target = $region32
      $region31: #{tpu_custom_call.1} parent=11 // pred_region
        %p309 = scmp.lt.s32.totalorder %s25, 0
        %s310 = scalar_select %p309, %s25, 0
        %s311 = scalar_lea.vmem %s5, %s310
      $region32: #{tpu_custom_call.1} parent=11 // pred_fallthru
        _
      // Predicated region
      $region33: #{tpu_custom_call.1} parent=11 // pred_check
        %p312 = pneg %p209
      $region34: #{tpu_custom_call.1} parent=11 // pred_check_branch
        %314 = sbr.rel (%p312) target = $region36
      $region35: #{tpu_custom_call.1} parent=11 // pred_region
        %p315 = scmp.lt.s32.totalorder %s25, 0
        %s316 = scalar_select %p315, %s25, 0
        %s317 = scalar_lea.vmem %s6, %s316
      $region36: #{tpu_custom_call.1} parent=11 // pred_fallthru
        _
    $region12: #{tpu_custom_call.1} parent=5 // pred_fallthru
      _
    %p318 = scmp.lt.s32.totalorder %s15, 2
    // Predicated region
    $region37: #{tpu_custom_call.1} parent=5 // pred_check
      %p319 = pneg %p318
    $region38: #{tpu_custom_call.1} parent=5 // pred_check_branch
      %321 = sbr.rel (%p319) target = $region40
    $region39: #{tpu_custom_call.1} parent=5 // pred_region
      // Predicated region
      $region41: #{tpu_custom_call.1} parent=39 // pred_check
        %p322 = pneg %p47
      $region42: #{tpu_custom_call.1} parent=39 // pred_check_branch
        %324 = sbr.rel (%p322) target = $region44
      $region43: #{tpu_custom_call.1} parent=39 // pred_region
        %p325 = scmp.lt.s32.totalorder %s22, 1
        %s326 = scalar_select %p325, %s22, 1
        %s327 = smul.addr %s326, 72
        %s328 = smul.addr %s327, 4
        %s329 = scalar_lea.vmem %s0, %s328
      $region44: #{tpu_custom_call.1} parent=39 // pred_fallthru
        _
    $region40: #{tpu_custom_call.1} parent=5 // pred_fallthru
      _
    %p330 = scmp.le.s32.totalorder 1, %s15
    %p331 = scmp.lt.s32.totalorder %s15, 3
    %p332 = pnand %p330, %p331
    %p333 = pneg %p332
    // Predicated region
    $region45: #{tpu_custom_call.1} parent=5 // pred_check
      _
    $region46: #{tpu_custom_call.1} parent=5 // pred_check_branch
      %335 = sbr.rel (%p332) target = $region48
    $region47: #{tpu_custom_call.1} parent=5 // pred_region
      %s336 = ssub.s32 %s15, 1
      %p337 = scmp.lt.s32.totalorder %s24, 1
      %s338 = scalar_select %p337, %s24, 1
      %s339 = smul.addr %s338, 72
      %s340 = smul.addr %s339, 4
      %s341 = scalar_lea.vmem %s0, %s340
      %p342 = pneg %p53
      %p343 = pneg %p50
      %p344 = scmp.lt.s32.totalorder %s25, 0
      %s345 = scalar_select %p344, %s25, 0
      %s346 = smul.addr %s345, 2
      %s347 = scalar_lea.vmem %s1, %s346
      %p348 = pneg %p79
      %p349 = pneg %p76
      %p350 = scmp.lt.s32.totalorder %s25, 0
      %s351 = scalar_select %p350, %s25, 0
      %s352 = scalar_lea.vmem %s2, %s351
      %p353 = pneg %p105
      %p354 = pneg %p102
      %p355 = scmp.lt.s32.totalorder %s25, 0
      %s356 = scalar_select %p355, %s25, 0
      %s357 = scalar_lea.vmem %s3, %s356
      %p358 = pneg %p131
      %p359 = pneg %p128
      %p360 = scmp.lt.s32.totalorder %s25, 0
      %s361 = scalar_select %p360, %s25, 0
      %s362 = smul.addr %s361, 2
      %s363 = scalar_lea.vmem %s4, %s362
      %p364 = pneg %p157
      %p365 = pneg %p154
      %p366 = scmp.lt.s32.totalorder %s25, 0
      %s367 = scalar_select %p366, %s25, 0
      %s368 = scalar_lea.vmem %s5, %s367
      %p369 = pneg %p183
      %p370 = pneg %p180
      %p371 = scmp.lt.s32.totalorder %s25, 0
      %s372 = scalar_select %p371, %s25, 0
      %s373 = scalar_lea.vmem %s6, %s372
      %p374 = pneg %p209
      %p375 = pneg %p206
      %p376 = pneg %p237
      %p377 = pneg %p234
      %p378 = scmp.lt.s32.totalorder %s24, 1
      %s379 = scalar_select %p378, %s24, 1
      %p380 = scmp.lt.s32.totalorder %s25, 0
      %s381 = scalar_select %p380, %s25, 0
      %s382 = smul.addr %s379, 8
      %s383 = sadd.s32 %s381, %s382
      %s384 = smul.addr %s383, 4
      %s385 = scalar_lea.vmem %s7, %s384
      %p386 = pneg %p265
      %p387 = pneg %p262
      %p388 = scmp.lt.s32.totalorder %s24, 1
      %s389 = scalar_select %p388, %s24, 1
      %p390 = scmp.lt.s32.totalorder %s25, 0
      %s391 = scalar_select %p390, %s25, 0
      %s392 = smul.addr %s389, 8
      %s393 = sadd.s32 %s391, %s392
      %s394 = smul.addr %s393, 8
      %s395 = scalar_lea.vmem %s8, %s394
      %p396 = scmp.lt.s32.totalorder %s24, 1
      %s397 = scalar_select %p396, %s24, 1
      %s398 = smul.addr %s397, 72
      %s399 = smul.addr %s398, 4
      %s400 = scalar_lea.vmem %s0, %s399
      %p401 = scmp.lt.s32.totalorder %s25, 0
      %s402 = scalar_select %p401, %s25, 0
      %s403 = smul.addr %s402, 2
      %s404 = scalar_lea.vmem %s1, %s403
      %p405 = scmp.lt.s32.totalorder %s25, 0
      %s406 = scalar_select %p405, %s25, 0
      %s407 = scalar_lea.vmem %s2, %s406
      %p408 = scmp.lt.s32.totalorder %s25, 0
      %s409 = scalar_select %p408, %s25, 0
      %s410 = scalar_lea.vmem %s3, %s409
      %p411 = scmp.lt.s32.totalorder %s25, 0
      %s412 = scalar_select %p411, %s25, 0
      %s413 = smul.addr %s412, 2
      %s414 = scalar_lea.vmem %s4, %s413
      %p415 = scmp.lt.s32.totalorder %s25, 0
      %s416 = scalar_select %p415, %s25, 0
      %s417 = scalar_lea.vmem %s5, %s416
      %p418 = scmp.lt.s32.totalorder %s25, 0
      %s419 = scalar_select %p418, %s25, 0
      %s420 = scalar_lea.vmem %s6, %s419
      %p421 = scmp.lt.s32.totalorder %s24, 1
      %s422 = scalar_select %p421, %s24, 1
      %p423 = scmp.lt.s32.totalorder %s25, 0
      %s424 = scalar_select %p423, %s25, 0
      %s425 = smul.addr %s422, 8
      %s426 = sadd.s32 %s424, %s425
      %s427 = smul.addr %s426, 4
      %s428 = scalar_lea.vmem %s7, %s427
      %p429 = scmp.lt.s32.totalorder %s24, 1
      %s430 = scalar_select %p429, %s24, 1
      %p431 = scmp.lt.s32.totalorder %s25, 0
      %s432 = scalar_select %p431, %s25, 0
      %s433 = smul.addr %s430, 8
      %s434 = sadd.s32 %s432, %s433
      %s435 = smul.addr %s434, 8
      %s436 = scalar_lea.vmem %s8, %s435
      %v438 = vld [vmem:[%s400] sm:$0xf]
      %v439 = vld [vmem:[%s400 + $0x8] sm:$0xf]
      %v440 = vld [vmem:[%s400 + $0x10] sm:$0xf]
      %v441 = vld [vmem:[%s400 + $0x18] sm:$0xf]
      %v442 = vld [vmem:[%s400 + $0x20] sm:$0xf]
      %v443 = vld [vmem:[%s400 + $0x28] sm:$0xf]
      %v444 = vld [vmem:[%s400 + $0x30] sm:$0xf]
      %v445 = vld [vmem:[%s400 + $0x38] sm:$0xf]
      %v446 = vld [vmem:[%s404] sm:$0x3]
      %s447 = scalar_lea.vmem %s400, 72
      %v448 = vld [vmem:[%s447] sm:$0xf]
      %v449 = vld [vmem:[%s447 + $0x8] sm:$0xf]
      %v450 = vld [vmem:[%s447 + $0x10] sm:$0xf]
      %v451 = vld [vmem:[%s447 + $0x18] sm:$0xf]
      %v452 = vld [vmem:[%s447 + $0x20] sm:$0xf]
      %v453 = vld [vmem:[%s447 + $0x28] sm:$0xf]
      %v454 = vld [vmem:[%s447 + $0x30] sm:$0xf]
      %v455 = vld [vmem:[%s447 + $0x38] sm:$0xf]
      %s456 = scalar_lea.vmem %s404, 2
      %v457 = vld [vmem:[%s456] sm:$0x3]
      %v466 = vunpack.c.l.b16 %v448
      %v467 = vunpack.c.l.b16 %v449
      %v468 = vunpack.c.l.b16 %v450
      %v469 = vunpack.c.l.b16 %v451
      %v470 = vunpack.c.l.b16 %v452
      %v471 = vunpack.c.l.b16 %v453
      %v472 = vunpack.c.l.b16 %v454
      %v473 = vunpack.c.l.b16 %v455
      %v474 = vpack.c.b16 %v467, %v466
      %v475 = vpack.c.b16 %v469, %v468
      %v476 = vpack.c.b16 %v471, %v470
      %v477 = vpack.c.b16 %v473, %v472
      %vm478 = vcmask 31744
      %v480 = vsel %vm478, %v474, 0
      %v483 = vsel %vm478, %v475, 0
      %v486 = vsel %vm478, %v476, 0
      %v489 = vsel %vm478, %v477, 0
      %vm491 = vcmask 1041408
      %v493 = vsel %vm491, %v457, 0
      %495 = vmatprep.subr.bf16.mxu0 0
      %496 = vmatpush1.bf16.msra.mxu0 %v493
      %497 = vmatprep.subr.bf16.mxu0 0
      %498 = vmatpush1.bf16.msra.mxu0 0
      %499 = vmatprep.subr.bf16.mxu0 0
      %500 = vmatpush1.bf16.msra.mxu0 0
      %501 = vmatprep.subr.bf16.mxu0 0
      %502 = vmatpush1.bf16.msra.mxu0 0
      %503 = vmatprep.subr.bf16.mxu0 0
      %504 = vmatpush1.bf16.msra.mxu0 0
      %505 = vmatprep.subr.bf16.mxu0 0
      %506 = vmatpush1.bf16.msra.mxu0 0
      %507 = vmatprep.subr.bf16.mxu0 0
      %508 = vmatpush1.bf16.msra.mxu0 0
      %509 = vmatprep.subr.bf16.mxu0 0
      %510 = vmatpush1.bf16.msra.mxu0 0
      %511 = vmatprep.subr.bf16.mxu0 0
      %512 = vmatpush1.bf16.msra.mxu0 0
      %513 = vmatprep.subr.bf16.mxu0 0
      %514 = vmatpush1.bf16.msra.mxu0 0
      %515 = vmatprep.subr.bf16.mxu0 0
      %516 = vmatpush1.bf16.msra.mxu0 0
      %517 = vmatprep.subr.bf16.mxu0 0
      %518 = vmatpush1.bf16.msra.mxu0 0
      %519 = vmatprep.subr.bf16.mxu0 0
      %520 = vmatpush1.bf16.msra.mxu0 0
      %521 = vmatprep.subr.bf16.mxu0 0
      %522 = vmatpush1.bf16.msra.mxu0 0
      %523 = vmatprep.subr.bf16.mxu0 0
      %524 = vmatpush1.bf16.msra.mxu0 0
      %525 = vmatprep.subr.bf16.mxu0 0
      %526 = vmatpush1.bf16.msra.mxu0 0
      %527 = vmatprep.mubr.bf16.mxu0 0
      %528 = vmatmul.mubr.bf16.gmra.mrb[0].mxu0 %v480
      %v529 = vpop.f32.mrb[0].mxu0
      %v530 = vadd.f32 0.0, %v529
      %v531 = vpop.f32.mrb[0].mxu0
      %v532 = vpop.f32.mrb[0].mxu0
      %v533 = vadd.f32 0.0, %v532
      %v534 = vpop.f32.mrb[0].mxu0
      %535 = vmatprep.mubr.bf16.mxu0 0
      %536 = vmatmul.mubr.bf16.gmra.mrb[0].mxu0 %v483
      %v537 = vpop.f32.mrb[0].mxu0
      %v538 = vadd.f32 0.0, %v537
      %v539 = vpop.f32.mrb[0].mxu0
      %v540 = vpop.f32.mrb[0].mxu0
      %v541 = vadd.f32 0.0, %v540
      %v542 = vpop.f32.mrb[0].mxu0
      %543 = vmatprep.mubr.bf16.mxu0 0
      %544 = vmatmul.mubr.bf16.gmra.mrb[0].mxu0 %v486
      %v545 = vpop.f32.mrb[0].mxu0
      %v546 = vadd.f32 0.0, %v545
      %v547 = vpop.f32.mrb[0].mxu0
      %v548 = vpop.f32.mrb[0].mxu0
      %v549 = vadd.f32 0.0, %v548
      %v550 = vpop.f32.mrb[0].mxu0
      %551 = vmatprep.mubr.bf16.mxu0 0
      %552 = vmatmul.mubr.bf16.gmra.mrb[0].mxu0 %v489
      %v553 = vpop.f32.mrb[0].mxu0
      %v554 = vadd.f32 0.0, %v553
      %v555 = vpop.f32.mrb[0].mxu0
      %v556 = vpop.f32.mrb[0].mxu0
      %v557 = vadd.f32 0.0, %v556
      %v558 = vpop.f32.mrb[0].mxu0
      %559 = vdwg.mxu0
      %v568 = vunpack.c.l.b16 %v438
      %v569 = vunpack.c.l.b16 %v439
      %v570 = vunpack.c.l.b16 %v440
      %v571 = vunpack.c.l.b16 %v441
      %v572 = vunpack.c.l.b16 %v442
      %v573 = vunpack.c.l.b16 %v443
      %v574 = vunpack.c.l.b16 %v444
      %v575 = vunpack.c.l.b16 %v445
      %v576 = vpack.c.b16 %v569, %v568
      %v577 = vpack.c.b16 %v571, %v570
      %v578 = vpack.c.b16 %v573, %v572
      %v579 = vpack.c.b16 %v575, %v574
      %v581 = vsel %vm478, %v576, 0
      %v584 = vsel %vm478, %v577, 0
      %v587 = vsel %vm478, %v578, 0
      %v590 = vsel %vm478, %v579, 0
      %v593 = vsel %vm491, %v446, 0
      %595 = vmatprep.subr.bf16.mxu0 0
      %596 = vmatpush1.bf16.msra.mxu0 %v593
      %597 = vmatprep.subr.bf16.mxu0 0
      %598 = vmatpush1.bf16.msra.mxu0 0
      %599 = vmatprep.subr.bf16.mxu0 0
      %600 = vmatpush1.bf16.msra.mxu0 0
      %601 = vmatprep.subr.bf16.mxu0 0
      %602 = vmatpush1.bf16.msra.mxu0 0
      %603 = vmatprep.subr.bf16.mxu0 0
      %604 = vmatpush1.bf16.msra.mxu0 0
      %605 = vmatprep.subr.bf16.mxu0 0
      %606 = vmatpush1.bf16.msra.mxu0 0
      %607 = vmatprep.subr.bf16.mxu0 0
      %608 = vmatpush1.bf16.msra.mxu0 0
      %609 = vmatprep.subr.bf16.mxu0 0
      %610 = vmatpush1.bf16.msra.mxu0 0
      %611 = vmatprep.subr.bf16.mxu0 0
      %612 = vmatpush1.bf16.msra.mxu0 0
      %613 = vmatprep.subr.bf16.mxu0 0
      %614 = vmatpush1.bf16.msra.mxu0 0
      %615 = vmatprep.subr.bf16.mxu0 0
      %616 = vmatpush1.bf16.msra.mxu0 0
      %617 = vmatprep.subr.bf16.mxu0 0
      %618 = vmatpush1.bf16.msra.mxu0 0
      %619 = vmatprep.subr.bf16.mxu0 0
      %620 = vmatpush1.bf16.msra.mxu0 0
      %621 = vmatprep.subr.bf16.mxu0 0
      %622 = vmatpush1.bf16.msra.mxu0 0
      %623 = vmatprep.subr.bf16.mxu0 0
      %624 = vmatpush1.bf16.msra.mxu0 0
      %625 = vmatprep.subr.bf16.mxu0 0
      %626 = vmatpush1.bf16.msra.mxu0 0
      %627 = vmatprep.mubr.bf16.mxu0 0
      %628 = vmatmul.mubr.bf16.gmra.mrb[0].mxu0 %v581
      %v629 = vpop.f32.mrb[0].mxu0
      %v630 = vadd.f32 %v530, %v629
      %v631 = vpop.f32.mrb[0].mxu0
      %v632 = vpop.f32.mrb[0].mxu0
      %v633 = vadd.f32 %v533, %v632
      %v634 = vpop.f32.mrb[0].mxu0
      %635 = vmatprep.mubr.bf16.mxu0 0
      %636 = vmatmul.mubr.bf16.gmra.mrb[0].mxu0 %v584
      %v637 = vpop.f32.mrb[0].mxu0
      %v638 = vadd.f32 %v538, %v637
      %v639 = vpop.f32.mrb[0].mxu0
      %v640 = vpop.f32.mrb[0].mxu0
      %v641 = vadd.f32 %v541, %v640
      %v642 = vpop.f32.mrb[0].mxu0
      %643 = vmatprep.mubr.bf16.mxu0 0
      %644 = vmatmul.mubr.bf16.gmra.mrb[0].mxu0 %v587
      %v645 = vpop.f32.mrb[0].mxu0
      %v646 = vadd.f32 %v546, %v645
      %v647 = vpop.f32.mrb[0].mxu0
      %v648 = vpop.f32.mrb[0].mxu0
      %v649 = vadd.f32 %v549, %v648
      %v650 = vpop.f32.mrb[0].mxu0
      %651 = vmatprep.mubr.bf16.mxu0 0
      %652 = vmatmul.mubr.bf16.gmra.mrb[0].mxu0 %v590
      %v653 = vpop.f32.mrb[0].mxu0
      %v654 = vadd.f32 %v554, %v653
      %v655 = vpop.f32.mrb[0].mxu0
      %v656 = vpop.f32.mrb[0].mxu0
      %v657 = vadd.f32 %v557, %v656
      %v658 = vpop.f32.mrb[0].mxu0
      %659 = vdwg.mxu0
      %v660 = vld [vmem:[%s400] sm:$0xf]
      %v661 = vld [vmem:[%s400 + $0x4] sm:$0x1]
      %v662 = vld [vmem:[%s400 + $0x8] sm:$0xf]
      %v663 = vld [vmem:[%s400 + $0xc] sm:$0x1]
      %v664 = vld [vmem:[%s400 + $0x10] sm:$0xf]
      %v665 = vld [vmem:[%s400 + $0x14] sm:$0x1]
      %v666 = vld [vmem:[%s400 + $0x18] sm:$0xf]
      %v667 = vld [vmem:[%s400 + $0x1c] sm:$0x1]
      %v668 = vld [vmem:[%s400 + $0x20] sm:$0xf]
      %v669 = vld [vmem:[%s400 + $0x24] sm:$0x1]
      %v670 = vld [vmem:[%s400 + $0x28] sm:$0xf]
      %v671 = vld [vmem:[%s400 + $0x2c] sm:$0x1]
      %v672 = vld [vmem:[%s400 + $0x30] sm:$0xf]
      %v673 = vld [vmem:[%s400 + $0x34] sm:$0x1]
      %v674 = vld [vmem:[%s400 + $0x38] sm:$0xf]
      %v675 = vld [vmem:[%s400 + $0x3c] sm:$0x1]
      %vm676 = vsmask.f32 3328
      %vm677 = vsmask.f32 7440
      %vm678 = vmor %vm676, %vm677
      %v680 = vshrl.u32 %v660, 16
      %v682 = vrot.slane %v680, 4
      %v683 = vshll.u32 %v660, 16
      %v685 = vrot.slane %v683, 5
      %v686 = vor.u32 %v682, %v685
      %v687 = vrot.slane %v686, 4
      %v689 = vshll.u32 %v661, 16
      %v691 = vrot.slane %v689, 5
      %v692 = vsel %vm678, %v687, %v691
      %v694 = vshrl.u32 %v662, 16
      %v696 = vrot.slane %v694, 4
      %v697 = vshll.u32 %v662, 16
      %v699 = vrot.slane %v697, 5
      %v700 = vor.u32 %v696, %v699
      %v701 = vrot.slane %v700, 4
      %v703 = vshll.u32 %v663, 16
      %v705 = vrot.slane %v703, 5
      %v706 = vsel %vm678, %v701, %v705
      %v708 = vshrl.u32 %v664, 16
      %v710 = vrot.slane %v708, 4
      %v711 = vshll.u32 %v664, 16
      %v713 = vrot.slane %v711, 5
      %v714 = vor.u32 %v710, %v713
      %v715 = vrot.slane %v714, 4
      %v717 = vshll.u32 %v665, 16
      %v719 = vrot.slane %v717, 5
      %v720 = vsel %vm678, %v715, %v719
      %v722 = vshrl.u32 %v666, 16
      %v724 = vrot.slane %v722, 4
      %v725 = vshll.u32 %v666, 16
      %v727 = vrot.slane %v725, 5
      %v728 = vor.u32 %v724, %v727
      %v729 = vrot.slane %v728, 4
      %v731 = vshll.u32 %v667, 16
      %v733 = vrot.slane %v731, 5
      %v734 = vsel %vm678, %v729, %v733
      %v736 = vshrl.u32 %v668, 16
      %v738 = vrot.slane %v736, 4
      %v739 = vshll.u32 %v668, 16
      %v741 = vrot.slane %v739, 5
      %v742 = vor.u32 %v738, %v741
      %v743 = vrot.slane %v742, 4
      %v745 = vshll.u32 %v669, 16
      %v747 = vrot.slane %v745, 5
      %v748 = vsel %vm678, %v743, %v747
      %v750 = vshrl.u32 %v670, 16
      %v752 = vrot.slane %v750, 4
      %v753 = vshll.u32 %v670, 16
      %v755 = vrot.slane %v753, 5
      %v756 = vor.u32 %v752, %v755
      %v757 = vrot.slane %v756, 4
      %v759 = vshll.u32 %v671, 16
      %v761 = vrot.slane %v759, 5
      %v762 = vsel %vm678, %v757, %v761
      %v764 = vshrl.u32 %v672, 16
      %v766 = vrot.slane %v764, 4
      %v767 = vshll.u32 %v672, 16
      %v769 = vrot.slane %v767, 5
      %v770 = vor.u32 %v766, %v769
      %v771 = vrot.slane %v770, 4
      %v773 = vshll.u32 %v673, 16
      %v775 = vrot.slane %v773, 5
      %v776 = vsel %vm678, %v771, %v775
      %v778 = vshrl.u32 %v674, 16
      %v780 = vrot.slane %v778, 4
      %v781 = vshll.u32 %v674, 16
      %v783 = vrot.slane %v781, 5
      %v784 = vor.u32 %v780, %v783
      %v785 = vrot.slane %v784, 4
      %v787 = vshll.u32 %v675, 16
      %v789 = vrot.slane %v787, 5
      %v790 = vsel %vm678, %v785, %v789
      %s791 = scalar_lea.vmem %s404, 4
      %v792 = vld [vmem:[%s791] sm:$0x3]
      %v793 = vunpack.c.l.b16 %v692
      %v794 = vunpack.c.l.b16 %v706
      %v795 = vunpack.c.l.b16 %v720
      %v796 = vunpack.c.l.b16 %v734
      %v797 = vunpack.c.l.b16 %v748
      %v798 = vunpack.c.l.b16 %v762
      %v799 = vunpack.c.l.b16 %v776
      %v800 = vunpack.c.l.b16 %v790
      %v801 = vpack.c.b16 %v794, %v793
      %v802 = vpack.c.b16 %v796, %v795
      %v803 = vpack.c.b16 %v798, %v797
      %v804 = vpack.c.b16 %v800, %v799
      %v806 = vsel %vm478, %v801, 0
      %v809 = vsel %vm478, %v802, 0
      %v812 = vsel %vm478, %v803, 0
      %v815 = vsel %vm478, %v804, 0
      %v818 = vsel %vm491, %v792, 0
      %820 = vmatprep.subr.bf16.mxu0 0
      %821 = vmatpush1.bf16.msra.mxu0 %v818
      %822 = vmatprep.subr.bf16.mxu0 0
      %823 = vmatpush1.bf16.msra.mxu0 0
      %824 = vmatprep.subr.bf16.mxu0 0
      %825 = vmatpush1.bf16.msra.mxu0 0
      %826 = vmatprep.subr.bf16.mxu0 0
      %827 = vmatpush1.bf16.msra.mxu0 0
      %828 = vmatprep.subr.bf16.mxu0 0
      %829 = vmatpush1.bf16.msra.mxu0 0
      %830 = vmatprep.subr.bf16.mxu0 0
      %831 = vmatpush1.bf16.msra.mxu0 0
      %832 = vmatprep.subr.bf16.mxu0 0
      %833 = vmatpush1.bf16.msra.mxu0 0
      %834 = vmatprep.subr.bf16.mxu0 0
      %835 = vmatpush1.bf16.msra.mxu0 0
      %836 = vmatprep.subr.bf16.mxu0 0
      %837 = vmatpush1.bf16.msra.mxu0 0
      %838 = vmatprep.subr.bf16.mxu0 0
      %839 = vmatpush1.bf16.msra.mxu0 0
      %840 = vmatprep.subr.bf16.mxu0 0
      %841 = vmatpush1.bf16.msra.mxu0 0
      %842 = vmatprep.subr.bf16.mxu0 0
      %843 = vmatpush1.bf16.msra.mxu0 0
      %844 = vmatprep.subr.bf16.mxu0 0
      %845 = vmatpush1.bf16.msra.mxu0 0
      %846 = vmatprep.subr.bf16.mxu0 0
      %847 = vmatpush1.bf16.msra.mxu0 0
      %848 = vmatprep.subr.bf16.mxu0 0
      %849 = vmatpush1.bf16.msra.mxu0 0
      %850 = vmatprep.subr.bf16.mxu0 0
      %851 = vmatpush1.bf16.msra.mxu0 0
      %852 = vmatprep.mubr.bf16.mxu0 0
      %853 = vmatmul.mubr.bf16.gmra.mrb[0].mxu0 %v806
      %v854 = vpop.f32.mrb[0].mxu0
      %v855 = vadd.f32 0.0, %v854
      %v856 = vpop.f32.mrb[0].mxu0
      %v857 = vpop.f32.mrb[0].mxu0
      %v858 = vadd.f32 0.0, %v857
      %v859 = vpop.f32.mrb[0].mxu0
      %860 = vmatprep.mubr.bf16.mxu0 0
      %861 = vmatmul.mubr.bf16.gmra.mrb[0].mxu0 %v809
      %v862 = vpop.f32.mrb[0].mxu0
      %v863 = vadd.f32 0.0, %v862
      %v864 = vpop.f32.mrb[0].mxu0
      %v865 = vpop.f32.mrb[0].mxu0
      %v866 = vadd.f32 0.0, %v865
      %v867 = vpop.f32.mrb[0].mxu0
      %868 = vmatprep.mubr.bf16.mxu0 0
      %869 = vmatmul.mubr.bf16.gmra.mrb[0].mxu0 %v812
      %v870 = vpop.f32.mrb[0].mxu0
      %v871 = vadd.f32 0.0, %v870
      %v872 = vpop.f32.mrb[0].mxu0
      %v873 = vpop.f32.mrb[0].mxu0
      %v874 = vadd.f32 0.0, %v873
      %v875 = vpop.f32.mrb[0].mxu0
      %876 = vmatprep.mubr.bf16.mxu0 0
      %877 = vmatmul.mubr.bf16.gmra.mrb[0].mxu0 %v815
      %v878 = vpop.f32.mrb[0].mxu0
      %v879 = vadd.f32 0.0, %v878
      %v880 = vpop.f32.mrb[0].mxu0
      %v881 = vpop.f32.mrb[0].mxu0
      %v882 = vadd.f32 0.0, %v881
      %v883 = vpop.f32.mrb[0].mxu0
      %884 = vdwg.mxu0
      %v885 = vadd.f32 %v630, %v855
      %v886 = vadd.f32 %v633, %v858
      %v887 = vadd.f32 %v638, %v863
      %v888 = vadd.f32 %v641, %v866
      %v889 = vadd.f32 %v646, %v871
      %v890 = vadd.f32 %v649, %v874
      %v891 = vadd.f32 %v654, %v879
      %v892 = vadd.f32 %v657, %v882
      %s893 = scalar_lea.vmem %s400, 144
      %v894 = vld [vmem:[%s893] sm:$0xf]
      %v895 = vld [vmem:[%s893 + $0x8] sm:$0xf]
      %v896 = vld [vmem:[%s893 + $0x10] sm:$0xf]
      %v897 = vld [vmem:[%s893 + $0x18] sm:$0xf]
      %v898 = vld [vmem:[%s893 + $0x20] sm:$0xf]
      %v899 = vld [vmem:[%s893 + $0x28] sm:$0xf]
      %v900 = vld [vmem:[%s893 + $0x30] sm:$0xf]
      %v901 = vld [vmem:[%s893 + $0x38] sm:$0xf]
      %s902 = scalar_lea.vmem %s404, 6
      %v903 = vld [vmem:[%s902] sm:$0x3]
      %v912 = vunpack.c.l.b16 %v894
      %v913 = vunpack.c.l.b16 %v895
      %v914 = vunpack.c.l.b16 %v896
      %v915 = vunpack.c.l.b16 %v897
      %v916 = vunpack.c.l.b16 %v898
      %v917 = vunpack.c.l.b16 %v899
      %v918 = vunpack.c.l.b16 %v900
      %v919 = vunpack.c.l.b16 %v901
      %v920 = vpack.c.b16 %v913, %v912
      %v921 = vpack.c.b16 %v915, %v914
      %v922 = vpack.c.b16 %v917, %v916
      %v923 = vpack.c.b16 %v919, %v918
      %v925 = vsel %vm478, %v920, 0
      %v928 = vsel %vm478, %v921, 0
      %v931 = vsel %vm478, %v922, 0
      %v934 = vsel %vm478, %v923, 0
      %v937 = vsel %vm491, %v903, 0
      %939 = vmatprep.subr.bf16.mxu0 0
      %940 = vmatpush1.bf16.msra.mxu0 %v937
      %941 = vmatprep.subr.bf16.mxu0 0
      %942 = vmatpush1.bf16.msra.mxu0 0
      %943 = vmatprep.subr.bf16.mxu0 0
      %944 = vmatpush1.bf16.msra.mxu0 0
      %945 = vmatprep.subr.bf16.mxu0 0
      %946 = vmatpush1.bf16.msra.mxu0 0
      %947 = vmatprep.subr.bf16.mxu0 0
      %948 = vmatpush1.bf16.msra.mxu0 0
      %949 = vmatprep.subr.bf16.mxu0 0
      %950 = vmatpush1.bf16.msra.mxu0 0
      %951 = vmatprep.subr.bf16.mxu0 0
      %952 = vmatpush1.bf16.msra.mxu0 0
      %953 = vmatprep.subr.bf16.mxu0 0
      %954 = vmatpush1.bf16.msra.mxu0 0
      %955 = vmatprep.subr.bf16.mxu0 0
      %956 = vmatpush1.bf16.msra.mxu0 0
      %957 = vmatprep.subr.bf16.mxu0 0
      %958 = vmatpush1.bf16.msra.mxu0 0
      %959 = vmatprep.subr.bf16.mxu0 0
      %960 = vmatpush1.bf16.msra.mxu0 0
      %961 = vmatprep.subr.bf16.mxu0 0
      %962 = vmatpush1.bf16.msra.mxu0 0
      %963 = vmatprep.subr.bf16.mxu0 0
      %964 = vmatpush1.bf16.msra.mxu0 0
      %965 = vmatprep.subr.bf16.mxu0 0
      %966 = vmatpush1.bf16.msra.mxu0 0
      %967 = vmatprep.subr.bf16.mxu0 0
      %968 = vmatpush1.bf16.msra.mxu0 0
      %969 = vmatprep.subr.bf16.mxu0 0
      %970 = vmatpush1.bf16.msra.mxu0 0
      %971 = vmatprep.mubr.bf16.mxu0 0
      %972 = vmatmul.mubr.bf16.gmra.mrb[0].mxu0 %v925
      %v973 = vpop.f32.mrb[0].mxu0
      %v974 = vadd.f32 0.0, %v973
      %v975 = vpop.f32.mrb[0].mxu0
      %v976 = vpop.f32.mrb[0].mxu0
      %v977 = vadd.f32 0.0, %v976
      %v978 = vpop.f32.mrb[0].mxu0
      %979 = vmatprep.mubr.bf16.mxu0 0
      %980 = vmatmul.mubr.bf16.gmra.mrb[0].mxu0 %v928
      %v981 = vpop.f32.mrb[0].mxu0
      %v982 = vadd.f32 0.0, %v981
      %v983 = vpop.f32.mrb[0].mxu0
      %v984 = vpop.f32.mrb[0].mxu0
      %v985 = vadd.f32 0.0, %v984
      %v986 = vpop.f32.mrb[0].mxu0
      %987 = vmatprep.mubr.bf16.mxu0 0
      %988 = vmatmul.mubr.bf16.gmra.mrb[0].mxu0 %v931
      %v989 = vpop.f32.mrb[0].mxu0
      %v990 = vadd.f32 0.0, %v989
      %v991 = vpop.f32.mrb[0].mxu0
      %v992 = vpop.f32.mrb[0].mxu0
      %v993 = vadd.f32 0.0, %v992
      %v994 = vpop.f32.mrb[0].mxu0
      %995 = vmatprep.mubr.bf16.mxu0 0
      %996 = vmatmul.mubr.bf16.gmra.mrb[0].mxu0 %v934
      %v997 = vpop.f32.mrb[0].mxu0
      %v998 = vadd.f32 0.0, %v997
      %v999 = vpop.f32.mrb[0].mxu0
      %v1000 = vpop.f32.mrb[0].mxu0
      %v1001 = vadd.f32 0.0, %v1000
      %v1002 = vpop.f32.mrb[0].mxu0
      %1003 = vdwg.mxu0
      %v1004 = vadd.f32 %v885, %v974
      %v1005 = vadd.f32 %v886, %v977
      %v1006 = vadd.f32 %v887, %v982
      %v1007 = vadd.f32 %v888, %v985
      %v1008 = vadd.f32 %v889, %v990
      %v1009 = vadd.f32 %v890, %v993
      %v1010 = vadd.f32 %v891, %v998
      %v1011 = vadd.f32 %v892, %v1001
      %s1012 = scalar_lea.vmem %s400, 216
      %v1013 = vld [vmem:[%s1012] sm:$0xf]
      %v1014 = vld [vmem:[%s1012 + $0x8] sm:$0xf]
      %v1015 = vld [vmem:[%s1012 + $0x10] sm:$0xf]
      %v1016 = vld [vmem:[%s1012 + $0x18] sm:$0xf]
      %v1017 = vld [vmem:[%s1012 + $0x20] sm:$0xf]
      %v1018 = vld [vmem:[%s1012 + $0x28] sm:$0xf]
      %v1019 = vld [vmem:[%s1012 + $0x30] sm:$0xf]
      %v1020 = vld [vmem:[%s1012 + $0x38] sm:$0xf]
      %s1021 = scalar_lea.vmem %s404, 8
      %v1022 = vld [vmem:[%s1021] sm:$0x3]
      %v1031 = vunpack.c.l.b16 %v1013
      %v1032 = vunpack.c.l.b16 %v1014
      %v1033 = vunpack.c.l.b16 %v1015
      %v1034 = vunpack.c.l.b16 %v1016
      %v1035 = vunpack.c.l.b16 %v1017
      %v1036 = vunpack.c.l.b16 %v1018
      %v1037 = vunpack.c.l.b16 %v1019
      %v1038 = vunpack.c.l.b16 %v1020
      %v1039 = vpack.c.b16 %v1032, %v1031
      %v1040 = vpack.c.b16 %v1034, %v1033
      %v1041 = vpack.c.b16 %v1036, %v1035
      %v1042 = vpack.c.b16 %v1038, %v1037
      %v1044 = vsel %vm478, %v1039, 0
      %v1047 = vsel %vm478, %v1040, 0
      %v1050 = vsel %vm478, %v1041, 0
      %v1053 = vsel %vm478, %v1042, 0
      %v1056 = vsel %vm491, %v1022, 0
      %1058 = vmatprep.subr.bf16.mxu0 0
      %1059 = vmatpush1.bf16.msra.mxu0 %v1056
      %1060 = vmatprep.subr.bf16.mxu0 0
      %1061 = vmatpush1.bf16.msra.mxu0 0
      %1062 = vmatprep.subr.bf16.mxu0 0
      %1063 = vmatpush1.bf16.msra.mxu0 0
      %1064 = vmatprep.subr.bf16.mxu0 0
      %1065 = vmatpush1.bf16.msra.mxu0 0
      %1066 = vmatprep.subr.bf16.mxu0 0
      %1067 = vmatpush1.bf16.msra.mxu0 0
      %1068 = vmatprep.subr.bf16.mxu0 0
      %1069 = vmatpush1.bf16.msra.mxu0 0
      %1070 = vmatprep.subr.bf16.mxu0 0
      %1071 = vmatpush1.bf16.msra.mxu0 0
      %1072 = vmatprep.subr.bf16.mxu0 0
      %1073 = vmatpush1.bf16.msra.mxu0 0
      %1074 = vmatprep.subr.bf16.mxu0 0
      %1075 = vmatpush1.bf16.msra.mxu0 0
      %1076 = vmatprep.subr.bf16.mxu0 0
      %1077 = vmatpush1.bf16.msra.mxu0 0
      %1078 = vmatprep.subr.bf16.mxu0 0
      %1079 = vmatpush1.bf16.msra.mxu0 0
      %1080 = vmatprep.subr.bf16.mxu0 0
      %1081 = vmatpush1.bf16.msra.mxu0 0
      %1082 = vmatprep.subr.bf16.mxu0 0
      %1083 = vmatpush1.bf16.msra.mxu0 0
      %1084 = vmatprep.subr.bf16.mxu0 0
      %1085 = vmatpush1.bf16.msra.mxu0 0
      %1086 = vmatprep.subr.bf16.mxu0 0
      %1087 = vmatpush1.bf16.msra.mxu0 0
      %1088 = vmatprep.subr.bf16.mxu0 0
      %1089 = vmatpush1.bf16.msra.mxu0 0
      %1090 = vmatprep.mubr.bf16.mxu0 0
      %1091 = vmatmul.mubr.bf16.gmra.mrb[0].mxu0 %v1044
      %v1092 = vpop.f32.mrb[0].mxu0
      %v1093 = vadd.f32 0.0, %v1092
      %v1094 = vpop.f32.mrb[0].mxu0
      %v1095 = vpop.f32.mrb[0].mxu0
      %v1096 = vadd.f32 0.0, %v1095
      %v1097 = vpop.f32.mrb[0].mxu0
      %1098 = vmatprep.mubr.bf16.mxu0 0
      %1099 = vmatmul.mubr.bf16.gmra.mrb[0].mxu0 %v1047
      %v1100 = vpop.f32.mrb[0].mxu0
      %v1101 = vadd.f32 0.0, %v1100
      %v1102 = vpop.f32.mrb[0].mxu0
      %v1103 = vpop.f32.mrb[0].mxu0
      %v1104 = vadd.f32 0.0, %v1103
      %v1105 = vpop.f32.mrb[0].mxu0
      %1106 = vmatprep.mubr.bf16.mxu0 0
      %1107 = vmatmul.mubr.bf16.gmra.mrb[0].mxu0 %v1050
      %v1108 = vpop.f32.mrb[0].mxu0
      %v1109 = vadd.f32 0.0, %v1108
      %v1110 = vpop.f32.mrb[0].mxu0
      %v1111 = vpop.f32.mrb[0].mxu0
      %v1112 = vadd.f32 0.0, %v1111
      %v1113 = vpop.f32.mrb[0].mxu0
      %1114 = vmatprep.mubr.bf16.mxu0 0
      %1115 = vmatmul.mubr.bf16.gmra.mrb[0].mxu0 %v1053
      %v1116 = vpop.f32.mrb[0].mxu0
      %v1117 = vadd.f32 0.0, %v1116
      %v1118 = vpop.f32.mrb[0].mxu0
      %v1119 = vpop.f32.mrb[0].mxu0
      %v1120 = vadd.f32 0.0, %v1119
      %v1121 = vpop.f32.mrb[0].mxu0
      %1122 = vdwg.mxu0
      %v1123 = vadd.f32 %v1004, %v1093
      %v1124 = vadd.f32 %v1005, %v1096
      %v1125 = vadd.f32 %v1006, %v1101
      %v1126 = vadd.f32 %v1007, %v1104
      %v1127 = vadd.f32 %v1008, %v1109
      %v1128 = vadd.f32 %v1009, %v1112
      %v1129 = vadd.f32 %v1010, %v1117
      %v1130 = vadd.f32 %v1011, %v1120
      %v1131 = vld [vmem:[%s414] sm:$0x3]
      %v1133 = vsel %vm491, %v1131, 0
      %1135 = vmatprep.subr.bf16.mxu0 0
      %1136 = vmatpush1.bf16.msra.mxu0 %v1133
      %1137 = vmatprep.subr.bf16.mxu0 0
      %1138 = vmatpush1.bf16.msra.mxu0 0
      %1139 = vmatprep.subr.bf16.mxu0 0
      %1140 = vmatpush1.bf16.msra.mxu0 0
      %1141 = vmatprep.subr.bf16.mxu0 0
      %1142 = vmatpush1.bf16.msra.mxu0 0
      %1143 = vmatprep.subr.bf16.mxu0 0
      %1144 = vmatpush1.bf16.msra.mxu0 0
      %1145 = vmatprep.subr.bf16.mxu0 0
      %1146 = vmatpush1.bf16.msra.mxu0 0
      %1147 = vmatprep.subr.bf16.mxu0 0
      %1148 = vmatpush1.bf16.msra.mxu0 0
      %1149 = vmatprep.subr.bf16.mxu0 0
      %1150 = vmatpush1.bf16.msra.mxu0 0
      %1151 = vmatprep.subr.bf16.mxu0 0
      %1152 = vmatpush1.bf16.msra.mxu0 0
      %1153 = vmatprep.subr.bf16.mxu0 0
      %1154 = vmatpush1.bf16.msra.mxu0 0
      %1155 = vmatprep.subr.bf16.mxu0 0
      %1156 = vmatpush1.bf16.msra.mxu0 0
      %1157 = vmatprep.subr.bf16.mxu0 0
      %1158 = vmatpush1.bf16.msra.mxu0 0
      %1159 = vmatprep.subr.bf16.mxu0 0
      %1160 = vmatpush1.bf16.msra.mxu0 0
      %1161 = vmatprep.subr.bf16.mxu0 0
      %1162 = vmatpush1.bf16.msra.mxu0 0
      %1163 = vmatprep.subr.bf16.mxu0 0
      %1164 = vmatpush1.bf16.msra.mxu0 0
      %1165 = vmatprep.subr.bf16.mxu0 0
      %1166 = vmatpush1.bf16.msra.mxu0 0
      %1167 = vmatprep.mubr.bf16.mxu0 0
      %1168 = vmatmul.mubr.bf16.gmra.mrb[0].mxu0 %v1044
      %v1169 = vpop.f32.mrb[0].mxu0
      %v1170 = vadd.f32 0.0, %v1169
      %v1171 = vpop.f32.mrb[0].mxu0
      %v1172 = vpop.f32.mrb[0].mxu0
      %v1173 = vadd.f32 0.0, %v1172
      %v1174 = vpop.f32.mrb[0].mxu0
      %1175 = vmatprep.mubr.bf16.mxu0 0
      %1176 = vmatmul.mubr.bf16.gmra.mrb[0].mxu0 %v1047
      %v1177 = vpop.f32.mrb[0].mxu0
      %v1178 = vadd.f32 0.0, %v1177
      %v1179 = vpop.f32.mrb[0].mxu0
      %v1180 = vpop.f32.mrb[0].mxu0
      %v1181 = vadd.f32 0.0, %v1180
      %v1182 = vpop.f32.mrb[0].mxu0
      %1183 = vmatprep.mubr.bf16.mxu0 0
      %1184 = vmatmul.mubr.bf16.gmra.mrb[0].mxu0 %v1050
      %v1185 = vpop.f32.mrb[0].mxu0
      %v1186 = vadd.f32 0.0, %v1185
      %v1187 = vpop.f32.mrb[0].mxu0
      %v1188 = vpop.f32.mrb[0].mxu0
      %v1189 = vadd.f32 0.0, %v1188
      %v1190 = vpop.f32.mrb[0].mxu0
      %1191 = vmatprep.mubr.bf16.mxu0 0
      %1192 = vmatmul.mubr.bf16.gmra.mrb[0].mxu0 %v1053
      %v1193 = vpop.f32.mrb[0].mxu0
      %v1194 = vadd.f32 0.0, %v1193
      %v1195 = vpop.f32.mrb[0].mxu0
      %v1196 = vpop.f32.mrb[0].mxu0
      %v1197 = vadd.f32 0.0, %v1196
      %v1198 = vpop.f32.mrb[0].mxu0
      %1199 = vdwg.mxu0
      %v1200 = vld [vmem:[%s417] sm:$0x1]
      %v1202 = vlaneseq
      %v1203 = vshrl.u32 %v1202, 7
      %v1204 = vsub.s32 0, %v1203
      %v1205 = vrot.slane %v1200, %v1204
      %v1207 = vmul.f32 %v1170, %v1205
      %v1208 = vmul.f32 %v1173, %v1205
      %v1209 = vmul.f32 %v1178, %v1205
      %v1210 = vmul.f32 %v1181, %v1205
      %v1211 = vmul.f32 %v1186, %v1205
      %v1212 = vmul.f32 %v1189, %v1205
      %v1213 = vmul.f32 %v1194, %v1205
      %v1214 = vmul.f32 %v1197, %v1205
      %v1215 = vld [vmem:[%s420] sm:$0x1]
      %v1217 = vlaneseq
      %v1218 = vshrl.u32 %v1217, 7
      %v1219 = vsub.s32 0, %v1218
      %v1220 = vrot.slane %v1215, %v1219
      %v1222 = vadd.f32 %v1207, %v1220
      %v1223 = vadd.f32 %v1208, %v1220
      %v1224 = vadd.f32 %v1209, %v1220
      %v1225 = vadd.f32 %v1210, %v1220
      %v1226 = vadd.f32 %v1211, %v1220
      %v1227 = vadd.f32 %v1212, %v1220
      %v1228 = vadd.f32 %v1213, %v1220
      %v1229 = vadd.f32 %v1214, %v1220
      %vm1230 = vcmask 64512
      %1231 = vst.msk [vmem:[%s436] sm:$0xff] %vm1230, %v1222
      %1232 = vst.msk [vmem:[%s436 + $0x8] sm:$0xff] %vm1230, %v1223
      %1233 = vst.msk [vmem:[%s436 + $0x10] sm:$0xff] %vm1230, %v1224
      %1234 = vst.msk [vmem:[%s436 + $0x18] sm:$0xff] %vm1230, %v1225
      %1235 = vst.msk [vmem:[%s436 + $0x20] sm:$0xff] %vm1230, %v1226
      %1236 = vst.msk [vmem:[%s436 + $0x28] sm:$0xff] %vm1230, %v1227
      %1237 = vst.msk [vmem:[%s436 + $0x30] sm:$0xff] %vm1230, %v1228
      %1238 = vst.msk [vmem:[%s436 + $0x38] sm:$0xff] %vm1230, %v1229
      %v1239 = vld [vmem:[%s893] sm:$0xf]
      %v1240 = vld [vmem:[%s893 + $0x4] sm:$0x1]
      %v1241 = vld [vmem:[%s893 + $0x8] sm:$0xf]
      %v1242 = vld [vmem:[%s893 + $0xc] sm:$0x1]
      %v1243 = vld [vmem:[%s893 + $0x10] sm:$0xf]
      %v1244 = vld [vmem:[%s893 + $0x14] sm:$0x1]
      %v1245 = vld [vmem:[%s893 + $0x18] sm:$0xf]
      %v1246 = vld [vmem:[%s893 + $0x1c] sm:$0x1]
      %v1247 = vld [vmem:[%s893 + $0x20] sm:$0xf]
      %v1248 = vld [vmem:[%s893 + $0x24] sm:$0x1]
      %v1249 = vld [vmem:[%s893 + $0x28] sm:$0xf]
      %v1250 = vld [vmem:[%s893 + $0x2c] sm:$0x1]
      %v1251 = vld [vmem:[%s893 + $0x30] sm:$0xf]
      %v1252 = vld [vmem:[%s893 + $0x34] sm:$0x1]
      %v1253 = vld [vmem:[%s893 + $0x38] sm:$0xf]
      %v1254 = vld [vmem:[%s893 + $0x3c] sm:$0x1]
      %v1256 = vshrl.u32 %v1239, 16
      %v1258 = vrot.slane %v1256, 4
      %v1259 = vshll.u32 %v1239, 16
      %v1261 = vrot.slane %v1259, 5
      %v1262 = vor.u32 %v1258, %v1261
      %v1263 = vrot.slane %v1262, 4
      %v1265 = vshll.u32 %v1240, 16
      %v1267 = vrot.slane %v1265, 5
      %v1268 = vsel %vm678, %v1263, %v1267
      %v1270 = vshrl.u32 %v1241, 16
      %v1272 = vrot.slane %v1270, 4
      %v1273 = vshll.u32 %v1241, 16
      %v1275 = vrot.slane %v1273, 5
      %v1276 = vor.u32 %v1272, %v1275
      %v1277 = vrot.slane %v1276, 4
      %v1279 = vshll.u32 %v1242, 16
      %v1281 = vrot.slane %v1279, 5
      %v1282 = vsel %vm678, %v1277, %v1281
      %v1284 = vshrl.u32 %v1243, 16
      %v1286 = vrot.slane %v1284, 4
      %v1287 = vshll.u32 %v1243, 16
      %v1289 = vrot.slane %v1287, 5
      %v1290 = vor.u32 %v1286, %v1289
      %v1291 = vrot.slane %v1290, 4
      %v1293 = vshll.u32 %v1244, 16
      %v1295 = vrot.slane %v1293, 5
      %v1296 = vsel %vm678, %v1291, %v1295
      %v1298 = vshrl.u32 %v1245, 16
      %v1300 = vrot.slane %v1298, 4
      %v1301 = vshll.u32 %v1245, 16
      %v1303 = vrot.slane %v1301, 5
      %v1304 = vor.u32 %v1300, %v1303
      %v1305 = vrot.slane %v1304, 4
      %v1307 = vshll.u32 %v1246, 16
      %v1309 = vrot.slane %v1307, 5
      %v1310 = vsel %vm678, %v1305, %v1309
      %v1312 = vshrl.u32 %v1247, 16
      %v1314 = vrot.slane %v1312, 4
      %v1315 = vshll.u32 %v1247, 16
      %v1317 = vrot.slane %v1315, 5
      %v1318 = vor.u32 %v1314, %v1317
      %v1319 = vrot.slane %v1318, 4
      %v1321 = vshll.u32 %v1248, 16
      %v1323 = vrot.slane %v1321, 5
      %v1324 = vsel %vm678, %v1319, %v1323
      %v1326 = vshrl.u32 %v1249, 16
      %v1328 = vrot.slane %v1326, 4
      %v1329 = vshll.u32 %v1249, 16
      %v1331 = vrot.slane %v1329, 5
      %v1332 = vor.u32 %v1328, %v1331
      %v1333 = vrot.slane %v1332, 4
      %v1335 = vshll.u32 %v1250, 16
      %v1337 = vrot.slane %v1335, 5
      %v1338 = vsel %vm678, %v1333, %v1337
      %v1340 = vshrl.u32 %v1251, 16
      %v1342 = vrot.slane %v1340, 4
      %v1343 = vshll.u32 %v1251, 16
      %v1345 = vrot.slane %v1343, 5
      %v1346 = vor.u32 %v1342, %v1345
      %v1347 = vrot.slane %v1346, 4
      %v1349 = vshll.u32 %v1252, 16
      %v1351 = vrot.slane %v1349, 5
      %v1352 = vsel %vm678, %v1347, %v1351
      %v1354 = vshrl.u32 %v1253, 16
      %v1356 = vrot.slane %v1354, 4
      %v1357 = vshll.u32 %v1253, 16
      %v1359 = vrot.slane %v1357, 5
      %v1360 = vor.u32 %v1356, %v1359
      %v1361 = vrot.slane %v1360, 4
      %v1363 = vshll.u32 %v1254, 16
      %v1365 = vrot.slane %v1363, 5
      %v1366 = vsel %vm678, %v1361, %v1365
      %s1367 = scalar_lea.vmem %s404, 10
      %v1368 = vld [vmem:[%s1367] sm:$0x3]
      %v1369 = vunpack.c.l.b16 %v1268
      %v1370 = vunpack.c.l.b16 %v1282
      %v1371 = vunpack.c.l.b16 %v1296
      %v1372 = vunpack.c.l.b16 %v1310
      %v1373 = vunpack.c.l.b16 %v1324
      %v1374 = vunpack.c.l.b16 %v1338
      %v1375 = vunpack.c.l.b16 %v1352
      %v1376 = vunpack.c.l.b16 %v1366
      %v1377 = vpack.c.b16 %v1370, %v1369
      %v1378 = vpack.c.b16 %v1372, %v1371
      %v1379 = vpack.c.b16 %v1374, %v1373
      %v1380 = vpack.c.b16 %v1376, %v1375
      %v1382 = vsel %vm478, %v1377, 0
      %v1385 = vsel %vm478, %v1378, 0
      %v1388 = vsel %vm478, %v1379, 0
      %v1391 = vsel %vm478, %v1380, 0
      %v1394 = vsel %vm491, %v1368, 0
      %1396 = vmatprep.subr.bf16.mxu0 0
      %1397 = vmatpush1.bf16.msra.mxu0 %v1394
      %1398 = vmatprep.subr.bf16.mxu0 0
      %1399 = vmatpush1.bf16.msra.mxu0 0
      %1400 = vmatprep.subr.bf16.mxu0 0
      %1401 = vmatpush1.bf16.msra.mxu0 0
      %1402 = vmatprep.subr.bf16.mxu0 0
      %1403 = vmatpush1.bf16.msra.mxu0 0
      %1404 = vmatprep.subr.bf16.mxu0 0
      %1405 = vmatpush1.bf16.msra.mxu0 0
      %1406 = vmatprep.subr.bf16.mxu0 0
      %1407 = vmatpush1.bf16.msra.mxu0 0
      %1408 = vmatprep.subr.bf16.mxu0 0
      %1409 = vmatpush1.bf16.msra.mxu0 0
      %1410 = vmatprep.subr.bf16.mxu0 0
      %1411 = vmatpush1.bf16.msra.mxu0 0
      %1412 = vmatprep.subr.bf16.mxu0 0
      %1413 = vmatpush1.bf16.msra.mxu0 0
      %1414 = vmatprep.subr.bf16.mxu0 0
      %1415 = vmatpush1.bf16.msra.mxu0 0
      %1416 = vmatprep.subr.bf16.mxu0 0
      %1417 = vmatpush1.bf16.msra.mxu0 0
      %1418 = vmatprep.subr.bf16.mxu0 0
      %1419 = vmatpush1.bf16.msra.mxu0 0
      %1420 = vmatprep.subr.bf16.mxu0 0
      %1421 = vmatpush1.bf16.msra.mxu0 0
      %1422 = vmatprep.subr.bf16.mxu0 0
      %1423 = vmatpush1.bf16.msra.mxu0 0
      %1424 = vmatprep.subr.bf16.mxu0 0
      %1425 = vmatpush1.bf16.msra.mxu0 0
      %1426 = vmatprep.subr.bf16.mxu0 0
      %1427 = vmatpush1.bf16.msra.mxu0 0
      %1428 = vmatprep.mubr.bf16.mxu0 0
      %1429 = vmatmul.mubr.bf16.gmra.mrb[0].mxu0 %v1382
      %v1430 = vpop.f32.mrb[0].mxu0
      %v1431 = vadd.f32 0.0, %v1430
      %v1432 = vpop.f32.mrb[0].mxu0
      %v1433 = vpop.f32.mrb[0].mxu0
      %v1434 = vadd.f32 0.0, %v1433
      %v1435 = vpop.f32.mrb[0].mxu0
      %1436 = vmatprep.mubr.bf16.mxu0 0
      %1437 = vmatmul.mubr.bf16.gmra.mrb[0].mxu0 %v1385
      %v1438 = vpop.f32.mrb[0].mxu0
      %v1439 = vadd.f32 0.0, %v1438
      %v1440 = vpop.f32.mrb[0].mxu0
      %v1441 = vpop.f32.mrb[0].mxu0
      %v1442 = vadd.f32 0.0, %v1441
      %v1443 = vpop.f32.mrb[0].mxu0
      %1444 = vmatprep.mubr.bf16.mxu0 0
      %1445 = vmatmul.mubr.bf16.gmra.mrb[0].mxu0 %v1388
      %v1446 = vpop.f32.mrb[0].mxu0
      %v1447 = vadd.f32 0.0, %v1446
      %v1448 = vpop.f32.mrb[0].mxu0
      %v1449 = vpop.f32.mrb[0].mxu0
      %v1450 = vadd.f32 0.0, %v1449
      %v1451 = vpop.f32.mrb[0].mxu0
      %1452 = vmatprep.mubr.bf16.mxu0 0
      %1453 = vmatmul.mubr.bf16.gmra.mrb[0].mxu0 %v1391
      %v1454 = vpop.f32.mrb[0].mxu0
      %v1455 = vadd.f32 0.0, %v1454
      %v1456 = vpop.f32.mrb[0].mxu0
      %v1457 = vpop.f32.mrb[0].mxu0
      %v1458 = vadd.f32 0.0, %v1457
      %v1459 = vpop.f32.mrb[0].mxu0
      %1460 = vdwg.mxu0
      %v1461 = vadd.f32 %v1123, %v1431
      %v1462 = vadd.f32 %v1124, %v1434
      %v1463 = vadd.f32 %v1125, %v1439
      %v1464 = vadd.f32 %v1126, %v1442
      %v1465 = vadd.f32 %v1127, %v1447
      %v1466 = vadd.f32 %v1128, %v1450
      %v1467 = vadd.f32 %v1129, %v1455
      %v1468 = vadd.f32 %v1130, %v1458
      %s1469 = scalar_lea.vmem %s400, 8
      %v1470 = vld [vmem:[%s1469] sm:$0xf]
      %v1471 = vld [vmem:[%s1469 + $0x8] sm:$0xf]
      %v1472 = vld [vmem:[%s1469 + $0x10] sm:$0xf]
      %v1473 = vld [vmem:[%s1469 + $0x18] sm:$0xf]
      %v1474 = vld [vmem:[%s1469 + $0x20] sm:$0xf]
      %v1475 = vld [vmem:[%s1469 + $0x28] sm:$0xf]
      %v1476 = vld [vmem:[%s1469 + $0x30] sm:$0xf]
      %v1477 = vld [vmem:[%s1469 + $0x38] sm:$0xf]
      %s1478 = scalar_lea.vmem %s404, 12
      %v1479 = vld [vmem:[%s1478] sm:$0x3]
      %v1488 = vunpack.c.l.b16 %v1470
      %v1489 = vunpack.c.l.b16 %v1471
      %v1490 = vunpack.c.l.b16 %v1472
      %v1491 = vunpack.c.l.b16 %v1473
      %v1492 = vunpack.c.l.b16 %v1474
      %v1493 = vunpack.c.l.b16 %v1475
      %v1494 = vunpack.c.l.b16 %v1476
      %v1495 = vunpack.c.l.b16 %v1477
      %v1496 = vpack.c.b16 %v1489, %v1488
      %v1497 = vpack.c.b16 %v1491, %v1490
      %v1498 = vpack.c.b16 %v1493, %v1492
      %v1499 = vpack.c.b16 %v1495, %v1494
      %v1501 = vsel %vm478, %v1496, 0
      %v1504 = vsel %vm478, %v1497, 0
      %v1507 = vsel %vm478, %v1498, 0
      %v1510 = vsel %vm478, %v1499, 0
      %v1513 = vsel %vm491, %v1479, 0
      %1515 = vmatprep.subr.bf16.mxu0 0
      %1516 = vmatpush1.bf16.msra.mxu0 %v1513
      %1517 = vmatprep.subr.bf16.mxu0 0
      %1518 = vmatpush1.bf16.msra.mxu0 0
      %1519 = vmatprep.subr.bf16.mxu0 0
      %1520 = vmatpush1.bf16.msra.mxu0 0
      %1521 = vmatprep.subr.bf16.mxu0 0
      %1522 = vmatpush1.bf16.msra.mxu0 0
      %1523 = vmatprep.subr.bf16.mxu0 0
      %1524 = vmatpush1.bf16.msra.mxu0 0
      %1525 = vmatprep.subr.bf16.mxu0 0
      %1526 = vmatpush1.bf16.msra.mxu0 0
      %1527 = vmatprep.subr.bf16.mxu0 0
      %1528 = vmatpush1.bf16.msra.mxu0 0
      %1529 = vmatprep.subr.bf16.mxu0 0
      %1530 = vmatpush1.bf16.msra.mxu0 0
      %1531 = vmatprep.subr.bf16.mxu0 0
      %1532 = vmatpush1.bf16.msra.mxu0 0
      %1533 = vmatprep.subr.bf16.mxu0 0
      %1534 = vmatpush1.bf16.msra.mxu0 0
      %1535 = vmatprep.subr.bf16.mxu0 0
      %1536 = vmatpush1.bf16.msra.mxu0 0
      %1537 = vmatprep.subr.bf16.mxu0 0
      %1538 = vmatpush1.bf16.msra.mxu0 0
      %1539 = vmatprep.subr.bf16.mxu0 0
      %1540 = vmatpush1.bf16.msra.mxu0 0
      %1541 = vmatprep.subr.bf16.mxu0 0
      %1542 = vmatpush1.bf16.msra.mxu0 0
      %1543 = vmatprep.subr.bf16.mxu0 0
      %1544 = vmatpush1.bf16.msra.mxu0 0
      %1545 = vmatprep.subr.bf16.mxu0 0
      %1546 = vmatpush1.bf16.msra.mxu0 0
      %1547 = vmatprep.mubr.bf16.mxu0 0
      %1548 = vmatmul.mubr.bf16.gmra.mrb[0].mxu0 %v1501
      %v1549 = vpop.f32.mrb[0].mxu0
      %v1550 = vadd.f32 0.0, %v1549
      %v1551 = vpop.f32.mrb[0].mxu0
      %v1552 = vpop.f32.mrb[0].mxu0
      %v1553 = vadd.f32 0.0, %v1552
      %v1554 = vpop.f32.mrb[0].mxu0
      %1555 = vmatprep.mubr.bf16.mxu0 0
      %1556 = vmatmul.mubr.bf16.gmra.mrb[0].mxu0 %v1504
      %v1557 = vpop.f32.mrb[0].mxu0
      %v1558 = vadd.f32 0.0, %v1557
      %v1559 = vpop.f32.mrb[0].mxu0
      %v1560 = vpop.f32.mrb[0].mxu0
      %v1561 = vadd.f32 0.0, %v1560
      %v1562 = vpop.f32.mrb[0].mxu0
      %1563 = vmatprep.mubr.bf16.mxu0 0
      %1564 = vmatmul.mubr.bf16.gmra.mrb[0].mxu0 %v1507
      %v1565 = vpop.f32.mrb[0].mxu0
      %v1566 = vadd.f32 0.0, %v1565
      %v1567 = vpop.f32.mrb[0].mxu0
      %v1568 = vpop.f32.mrb[0].mxu0
      %v1569 = vadd.f32 0.0, %v1568
      %v1570 = vpop.f32.mrb[0].mxu0
      %1571 = vmatprep.mubr.bf16.mxu0 0
      %1572 = vmatmul.mubr.bf16.gmra.mrb[0].mxu0 %v1510
      %v1573 = vpop.f32.mrb[0].mxu0
      %v1574 = vadd.f32 0.0, %v1573
      %v1575 = vpop.f32.mrb[0].mxu0
      %v1576 = vpop.f32.mrb[0].mxu0
      %v1577 = vadd.f32 0.0, %v1576
      %v1578 = vpop.f32.mrb[0].mxu0
      %1579 = vdwg.mxu0
      %v1580 = vadd.f32 %v1461, %v1550
      %v1581 = vadd.f32 %v1462, %v1553
      %v1582 = vadd.f32 %v1463, %v1558
      %v1583 = vadd.f32 %v1464, %v1561
      %v1584 = vadd.f32 %v1465, %v1566
      %v1585 = vadd.f32 %v1466, %v1569
      %v1586 = vadd.f32 %v1467, %v1574
      %v1587 = vadd.f32 %v1468, %v1577
      %s1588 = scalar_lea.vmem %s400, 80
      %v1589 = vld [vmem:[%s1588] sm:$0xf]
      %v1590 = vld [vmem:[%s1588 + $0x8] sm:$0xf]
      %v1591 = vld [vmem:[%s1588 + $0x10] sm:$0xf]
      %v1592 = vld [vmem:[%s1588 + $0x18] sm:$0xf]
      %v1593 = vld [vmem:[%s1588 + $0x20] sm:$0xf]
      %v1594 = vld [vmem:[%s1588 + $0x28] sm:$0xf]
      %v1595 = vld [vmem:[%s1588 + $0x30] sm:$0xf]
      %v1596 = vld [vmem:[%s1588 + $0x38] sm:$0xf]
      %s1597 = scalar_lea.vmem %s404, 14
      %v1598 = vld [vmem:[%s1597] sm:$0x3]
      %v1607 = vunpack.c.l.b16 %v1589
      %v1608 = vunpack.c.l.b16 %v1590
      %v1609 = vunpack.c.l.b16 %v1591
      %v1610 = vunpack.c.l.b16 %v1592
      %v1611 = vunpack.c.l.b16 %v1593
      %v1612 = vunpack.c.l.b16 %v1594
      %v1613 = vunpack.c.l.b16 %v1595
      %v1614 = vunpack.c.l.b16 %v1596
      %v1615 = vpack.c.b16 %v1608, %v1607
      %v1616 = vpack.c.b16 %v1610, %v1609
      %v1617 = vpack.c.b16 %v1612, %v1611
      %v1618 = vpack.c.b16 %v1614, %v1613
      %v1620 = vsel %vm478, %v1615, 0
      %v1623 = vsel %vm478, %v1616, 0
      %v1626 = vsel %vm478, %v1617, 0
      %v1629 = vsel %vm478, %v1618, 0
      %v1632 = vsel %vm491, %v1598, 0
      %1634 = vmatprep.subr.bf16.mxu0 0
      %1635 = vmatpush1.bf16.msra.mxu0 %v1632
      %1636 = vmatprep.subr.bf16.mxu0 0
      %1637 = vmatpush1.bf16.msra.mxu0 0
      %1638 = vmatprep.subr.bf16.mxu0 0
      %1639 = vmatpush1.bf16.msra.mxu0 0
      %1640 = vmatprep.subr.bf16.mxu0 0
      %1641 = vmatpush1.bf16.msra.mxu0 0
      %1642 = vmatprep.subr.bf16.mxu0 0
      %1643 = vmatpush1.bf16.msra.mxu0 0
      %1644 = vmatprep.subr.bf16.mxu0 0
      %1645 = vmatpush1.bf16.msra.mxu0 0
      %1646 = vmatprep.subr.bf16.mxu0 0
      %1647 = vmatpush1.bf16.msra.mxu0 0
      %1648 = vmatprep.subr.bf16.mxu0 0
      %1649 = vmatpush1.bf16.msra.mxu0 0
      %1650 = vmatprep.subr.bf16.mxu0 0
      %1651 = vmatpush1.bf16.msra.mxu0 0
      %1652 = vmatprep.subr.bf16.mxu0 0
      %1653 = vmatpush1.bf16.msra.mxu0 0
      %1654 = vmatprep.subr.bf16.mxu0 0
      %1655 = vmatpush1.bf16.msra.mxu0 0
      %1656 = vmatprep.subr.bf16.mxu0 0
      %1657 = vmatpush1.bf16.msra.mxu0 0
      %1658 = vmatprep.subr.bf16.mxu0 0
      %1659 = vmatpush1.bf16.msra.mxu0 0
      %1660 = vmatprep.subr.bf16.mxu0 0
      %1661 = vmatpush1.bf16.msra.mxu0 0
      %1662 = vmatprep.subr.bf16.mxu0 0
      %1663 = vmatpush1.bf16.msra.mxu0 0
      %1664 = vmatprep.subr.bf16.mxu0 0
      %1665 = vmatpush1.bf16.msra.mxu0 0
      %1666 = vmatprep.mubr.bf16.mxu0 0
      %1667 = vmatmul.mubr.bf16.gmra.mrb[0].mxu0 %v1620
      %v1668 = vpop.f32.mrb[0].mxu0
      %v1669 = vadd.f32 0.0, %v1668
      %v1670 = vpop.f32.mrb[0].mxu0
      %v1671 = vpop.f32.mrb[0].mxu0
      %v1672 = vadd.f32 0.0, %v1671
      %v1673 = vpop.f32.mrb[0].mxu0
      %1674 = vmatprep.mubr.bf16.mxu0 0
      %1675 = vmatmul.mubr.bf16.gmra.mrb[0].mxu0 %v1623
      %v1676 = vpop.f32.mrb[0].mxu0
      %v1677 = vadd.f32 0.0, %v1676
      %v1678 = vpop.f32.mrb[0].mxu0
      %v1679 = vpop.f32.mrb[0].mxu0
      %v1680 = vadd.f32 0.0, %v1679
      %v1681 = vpop.f32.mrb[0].mxu0
      %1682 = vmatprep.mubr.bf16.mxu0 0
      %1683 = vmatmul.mubr.bf16.gmra.mrb[0].mxu0 %v1626
      %v1684 = vpop.f32.mrb[0].mxu0
      %v1685 = vadd.f32 0.0, %v1684
      %v1686 = vpop.f32.mrb[0].mxu0
      %v1687 = vpop.f32.mrb[0].mxu0
      %v1688 = vadd.f32 0.0, %v1687
      %v1689 = vpop.f32.mrb[0].mxu0
      %1690 = vmatprep.mubr.bf16.mxu0 0
      %1691 = vmatmul.mubr.bf16.gmra.mrb[0].mxu0 %v1629
      %v1692 = vpop.f32.mrb[0].mxu0
      %v1693 = vadd.f32 0.0, %v1692
      %v1694 = vpop.f32.mrb[0].mxu0
      %v1695 = vpop.f32.mrb[0].mxu0
      %v1696 = vadd.f32 0.0, %v1695
      %v1697 = vpop.f32.mrb[0].mxu0
      %1698 = vdwg.mxu0
      %v1699 = vadd.f32 %v1580, %v1669
      %v1700 = vadd.f32 %v1581, %v1672
      %v1701 = vadd.f32 %v1582, %v1677
      %v1702 = vadd.f32 %v1583, %v1680
      %v1703 = vadd.f32 %v1584, %v1685
      %v1704 = vadd.f32 %v1585, %v1688
      %v1705 = vadd.f32 %v1586, %v1693
      %v1706 = vadd.f32 %v1587, %v1696
      %v1707 = vld [vmem:[%s1469] sm:$0xf]
      %v1708 = vld [vmem:[%s1469 + $0x4] sm:$0x1]
      %v1709 = vld [vmem:[%s1469 + $0x8] sm:$0xf]
      %v1710 = vld [vmem:[%s1469 + $0xc] sm:$0x1]
      %v1711 = vld [vmem:[%s1469 + $0x10] sm:$0xf]
      %v1712 = vld [vmem:[%s1469 + $0x14] sm:$0x1]
      %v1713 = vld [vmem:[%s1469 + $0x18] sm:$0xf]
      %v1714 = vld [vmem:[%s1469 + $0x1c] sm:$0x1]
      %v1715 = vld [vmem:[%s1469 + $0x20] sm:$0xf]
      %v1716 = vld [vmem:[%s1469 + $0x24] sm:$0x1]
      %v1717 = vld [vmem:[%s1469 + $0x28] sm:$0xf]
      %v1718 = vld [vmem:[%s1469 + $0x2c] sm:$0x1]
      %v1719 = vld [vmem:[%s1469 + $0x30] sm:$0xf]
      %v1720 = vld [vmem:[%s1469 + $0x34] sm:$0x1]
      %v1721 = vld [vmem:[%s1469 + $0x38] sm:$0xf]
      %v1722 = vld [vmem:[%s1469 + $0x3c] sm:$0x1]
      %v1724 = vshrl.u32 %v1707, 16
      %v1726 = vrot.slane %v1724, 4
      %v1727 = vshll.u32 %v1707, 16
      %v1729 = vrot.slane %v1727, 5
      %v1730 = vor.u32 %v1726, %v1729
      %v1731 = vrot.slane %v1730, 4
      %v1733 = vshll.u32 %v1708, 16
      %v1735 = vrot.slane %v1733, 5
      %v1736 = vsel %vm678, %v1731, %v1735
      %v1738 = vshrl.u32 %v1709, 16
      %v1740 = vrot.slane %v1738, 4
      %v1741 = vshll.u32 %v1709, 16
      %v1743 = vrot.slane %v1741, 5
      %v1744 = vor.u32 %v1740, %v1743
      %v1745 = vrot.slane %v1744, 4
      %v1747 = vshll.u32 %v1710, 16
      %v1749 = vrot.slane %v1747, 5
      %v1750 = vsel %vm678, %v1745, %v1749
      %v1752 = vshrl.u32 %v1711, 16
      %v1754 = vrot.slane %v1752, 4
      %v1755 = vshll.u32 %v1711, 16
      %v1757 = vrot.slane %v1755, 5
      %v1758 = vor.u32 %v1754, %v1757
      %v1759 = vrot.slane %v1758, 4
      %v1761 = vshll.u32 %v1712, 16
      %v1763 = vrot.slane %v1761, 5
      %v1764 = vsel %vm678, %v1759, %v1763
      %v1766 = vshrl.u32 %v1713, 16
      %v1768 = vrot.slane %v1766, 4
      %v1769 = vshll.u32 %v1713, 16
      %v1771 = vrot.slane %v1769, 5
      %v1772 = vor.u32 %v1768, %v1771
      %v1773 = vrot.slane %v1772, 4
      %v1775 = vshll.u32 %v1714, 16
      %v1777 = vrot.slane %v1775, 5
      %v1778 = vsel %vm678, %v1773, %v1777
      %v1780 = vshrl.u32 %v1715, 16
      %v1782 = vrot.slane %v1780, 4
      %v1783 = vshll.u32 %v1715, 16
      %v1785 = vrot.slane %v1783, 5
      %v1786 = vor.u32 %v1782, %v1785
      %v1787 = vrot.slane %v1786, 4
      %v1789 = vshll.u32 %v1716, 16
      %v1791 = vrot.slane %v1789, 5
      %v1792 = vsel %vm678, %v1787, %v1791
      %v1794 = vshrl.u32 %v1717, 16
      %v1796 = vrot.slane %v1794, 4
      %v1797 = vshll.u32 %v1717, 16
      %v1799 = vrot.slane %v1797, 5
      %v1800 = vor.u32 %v1796, %v1799
      %v1801 = vrot.slane %v1800, 4
      %v1803 = vshll.u32 %v1718, 16
      %v1805 = vrot.slane %v1803, 5
      %v1806 = vsel %vm678, %v1801, %v1805
      %v1808 = vshrl.u32 %v1719, 16
      %v1810 = vrot.slane %v1808, 4
      %v1811 = vshll.u32 %v1719, 16
      %v1813 = vrot.slane %v1811, 5
      %v1814 = vor.u32 %v1810, %v1813
      %v1815 = vrot.slane %v1814, 4
      %v1817 = vshll.u32 %v1720, 16
      %v1819 = vrot.slane %v1817, 5
      %v1820 = vsel %vm678, %v1815, %v1819
      %v1822 = vshrl.u32 %v1721, 16
      %v1824 = vrot.slane %v1822, 4
      %v1825 = vshll.u32 %v1721, 16
      %v1827 = vrot.slane %v1825, 5
      %v1828 = vor.u32 %v1824, %v1827
      %v1829 = vrot.slane %v1828, 4
      %v1831 = vshll.u32 %v1722, 16
      %v1833 = vrot.slane %v1831, 5
      %v1834 = vsel %vm678, %v1829, %v1833
      %s1835 = scalar_lea.vmem %s404, 16
      %v1836 = vld [vmem:[%s1835] sm:$0x3]
      %v1837 = vunpack.c.l.b16 %v1736
      %v1838 = vunpack.c.l.b16 %v1750
      %v1839 = vunpack.c.l.b16 %v1764
      %v1840 = vunpack.c.l.b16 %v1778
      %v1841 = vunpack.c.l.b16 %v1792
      %v1842 = vunpack.c.l.b16 %v1806
      %v1843 = vunpack.c.l.b16 %v1820
      %v1844 = vunpack.c.l.b16 %v1834
      %v1845 = vpack.c.b16 %v1838, %v1837
      %v1846 = vpack.c.b16 %v1840, %v1839
      %v1847 = vpack.c.b16 %v1842, %v1841
      %v1848 = vpack.c.b16 %v1844, %v1843
      %v1850 = vsel %vm478, %v1845, 0
      %v1853 = vsel %vm478, %v1846, 0
      %v1856 = vsel %vm478, %v1847, 0
      %v1859 = vsel %vm478, %v1848, 0
      %v1862 = vsel %vm491, %v1836, 0
      %1864 = vmatprep.subr.bf16.mxu0 0
      %1865 = vmatpush1.bf16.msra.mxu0 %v1862
      %1866 = vmatprep.subr.bf16.mxu0 0
      %1867 = vmatpush1.bf16.msra.mxu0 0
      %1868 = vmatprep.subr.bf16.mxu0 0
      %1869 = vmatpush1.bf16.msra.mxu0 0
      %1870 = vmatprep.subr.bf16.mxu0 0
      %1871 = vmatpush1.bf16.msra.mxu0 0
      %1872 = vmatprep.subr.bf16.mxu0 0
      %1873 = vmatpush1.bf16.msra.mxu0 0
      %1874 = vmatprep.subr.bf16.mxu0 0
      %1875 = vmatpush1.bf16.msra.mxu0 0
      %1876 = vmatprep.subr.bf16.mxu0 0
      %1877 = vmatpush1.bf16.msra.mxu0 0
      %1878 = vmatprep.subr.bf16.mxu0 0
      %1879 = vmatpush1.bf16.msra.mxu0 0
      %1880 = vmatprep.subr.bf16.mxu0 0
      %1881 = vmatpush1.bf16.msra.mxu0 0
      %1882 = vmatprep.subr.bf16.mxu0 0
      %1883 = vmatpush1.bf16.msra.mxu0 0
      %1884 = vmatprep.subr.bf16.mxu0 0
      %1885 = vmatpush1.bf16.msra.mxu0 0
      %1886 = vmatprep.subr.bf16.mxu0 0
      %1887 = vmatpush1.bf16.msra.mxu0 0
      %1888 = vmatprep.subr.bf16.mxu0 0
      %1889 = vmatpush1.bf16.msra.mxu0 0
      %1890 = vmatprep.subr.bf16.mxu0 0
      %1891 = vmatpush1.bf16.msra.mxu0 0
      %1892 = vmatprep.subr.bf16.mxu0 0
      %1893 = vmatpush1.bf16.msra.mxu0 0
      %1894 = vmatprep.subr.bf16.mxu0 0
      %1895 = vmatpush1.bf16.msra.mxu0 0
      %1896 = vmatprep.mubr.bf16.mxu0 0
      %1897 = vmatmul.mubr.bf16.gmra.mrb[0].mxu0 %v1850
      %v1898 = vpop.f32.mrb[0].mxu0
      %v1899 = vadd.f32 0.0, %v1898
      %v1900 = vpop.f32.mrb[0].mxu0
      %v1901 = vpop.f32.mrb[0].mxu0
      %v1902 = vadd.f32 0.0, %v1901
      %v1903 = vpop.f32.mrb[0].mxu0
      %1904 = vmatprep.mubr.bf16.mxu0 0
      %1905 = vmatmul.mubr.bf16.gmra.mrb[0].mxu0 %v1853
      %v1906 = vpop.f32.mrb[0].mxu0
      %v1907 = vadd.f32 0.0, %v1906
      %v1908 = vpop.f32.mrb[0].mxu0
      %v1909 = vpop.f32.mrb[0].mxu0
      %v1910 = vadd.f32 0.0, %v1909
      %v1911 = vpop.f32.mrb[0].mxu0
      %1912 = vmatprep.mubr.bf16.mxu0 0
      %1913 = vmatmul.mubr.bf16.gmra.mrb[0].mxu0 %v1856
      %v1914 = vpop.f32.mrb[0].mxu0
      %v1915 = vadd.f32 0.0, %v1914
      %v1916 = vpop.f32.mrb[0].mxu0
      %v1917 = vpop.f32.mrb[0].mxu0
      %v1918 = vadd.f32 0.0, %v1917
      %v1919 = vpop.f32.mrb[0].mxu0
      %1920 = vmatprep.mubr.bf16.mxu0 0
      %1921 = vmatmul.mubr.bf16.gmra.mrb[0].mxu0 %v1859
      %v1922 = vpop.f32.mrb[0].mxu0
      %v1923 = vadd.f32 0.0, %v1922
      %v1924 = vpop.f32.mrb[0].mxu0
      %v1925 = vpop.f32.mrb[0].mxu0
      %v1926 = vadd.f32 0.0, %v1925
      %v1927 = vpop.f32.mrb[0].mxu0
      %1928 = vdwg.mxu0
      %v1929 = vadd.f32 %v1699, %v1899
      %v1930 = vadd.f32 %v1700, %v1902
      %v1931 = vadd.f32 %v1701, %v1907
      %v1932 = vadd.f32 %v1702, %v1910
      %v1933 = vadd.f32 %v1703, %v1915
      %v1934 = vadd.f32 %v1704, %v1918
      %v1935 = vadd.f32 %v1705, %v1923
      %v1936 = vadd.f32 %v1706, %v1926
      %v1937 = vld [vmem:[%s407] sm:$0x1]
      %v1939 = vlaneseq
      %v1940 = vshrl.u32 %v1939, 7
      %v1941 = vsub.s32 0, %v1940
      %v1942 = vrot.slane %v1937, %v1941
      %v1944 = vmul.f32 %v1929, %v1942
      %v1945 = vmul.f32 %v1930, %v1942
      %v1946 = vmul.f32 %v1931, %v1942
      %v1947 = vmul.f32 %v1932, %v1942
      %v1948 = vmul.f32 %v1933, %v1942
      %v1949 = vmul.f32 %v1934, %v1942
      %v1950 = vmul.f32 %v1935, %v1942
      %v1951 = vmul.f32 %v1936, %v1942
      %v1952 = vld [vmem:[%s410] sm:$0x1]
      %v1954 = vlaneseq
      %v1955 = vshrl.u32 %v1954, 7
      %v1956 = vsub.s32 0, %v1955
      %v1957 = vrot.slane %v1952, %v1956
      %v1959 = vadd.f32 %v1944, %v1957
      %v1960 = vadd.f32 %v1945, %v1957
      %v1961 = vadd.f32 %v1946, %v1957
      %v1962 = vadd.f32 %v1947, %v1957
      %v1963 = vadd.f32 %v1948, %v1957
      %v1964 = vadd.f32 %v1949, %v1957
      %v1965 = vadd.f32 %v1950, %v1957
      %v1966 = vadd.f32 %v1951, %v1957
      %v1967 = vmax.f32 %v1959, 0.0
      %v1968 = vmax.f32 %v1960, 0.0
      %v1969 = vmax.f32 %v1961, 0.0
      %v1970 = vmax.f32 %v1962, 0.0
      %v1971 = vmax.f32 %v1963, 0.0
      %v1972 = vmax.f32 %v1964, 0.0
      %v1973 = vmax.f32 %v1965, 0.0
      %v1974 = vmax.f32 %v1966, 0.0
      %v1975 = vpack.c.bf16 %v1968, %v1967
      %v1976 = vpack.c.bf16 %v1970, %v1969
      %v1977 = vpack.c.bf16 %v1972, %v1971
      %v1978 = vpack.c.bf16 %v1974, %v1973
      %v1983 = vunpack.c.l.b16 %v1975
      %v1984 = vunpack.c.h.b16 %v1975
      %v1985 = vunpack.c.l.b16 %v1976
      %v1986 = vunpack.c.h.b16 %v1976
      %v1987 = vunpack.c.l.b16 %v1977
      %v1988 = vunpack.c.h.b16 %v1977
      %v1989 = vunpack.c.l.b16 %v1978
      %v1990 = vunpack.c.h.b16 %v1978
      %v1991 = vpack.c.b16 %v1983, %v1983
      %v1992 = vpack.c.b16 %v1984, %v1984
      %v1993 = vpack.c.b16 %v1985, %v1985
      %v1994 = vpack.c.b16 %v1986, %v1986
      %v1995 = vpack.c.b16 %v1987, %v1987
      %v1996 = vpack.c.b16 %v1988, %v1988
      %v1997 = vpack.c.b16 %v1989, %v1989
      %v1998 = vpack.c.b16 %v1990, %v1990
      %vm2007 = vcmask 60416
      %2008 = vst.msk [vmem:[%s428] sm:$0xf] %vm2007, %v1991
      %2009 = vst.msk [vmem:[%s428 + $0x4] sm:$0xf] %vm2007, %v1992
      %2010 = vst.msk [vmem:[%s428 + $0x8] sm:$0xf] %vm2007, %v1993
      %2011 = vst.msk [vmem:[%s428 + $0xc] sm:$0xf] %vm2007, %v1994
      %2012 = vst.msk [vmem:[%s428 + $0x10] sm:$0xf] %vm2007, %v1995
      %2013 = vst.msk [vmem:[%s428 + $0x14] sm:$0xf] %vm2007, %v1996
      %2014 = vst.msk [vmem:[%s428 + $0x18] sm:$0xf] %vm2007, %v1997
      %2015 = vst.msk [vmem:[%s428 + $0x1c] sm:$0xf] %vm2007, %v1998
      %p2016 = scmp.lt.s32.totalorder %s24, 1
      %s2017 = scalar_select %p2016, %s24, 1
      %p2018 = scmp.lt.s32.totalorder %s25, 0
      %s2019 = scalar_select %p2018, %s25, 0
      %s2020 = smul.addr %s2017, 8
      %s2021 = sadd.s32 %s2019, %s2020
      %s2022 = smul.addr %s2021, 4
      %s2023 = scalar_lea.vmem %s7, %s2022
      %p2024 = scmp.lt.s32.totalorder %s24, 1
      %s2025 = scalar_select %p2024, %s24, 1
      %p2026 = scmp.lt.s32.totalorder %s25, 0
      %s2027 = scalar_select %p2026, %s25, 0
      %s2028 = smul.addr %s2025, 8
      %s2029 = sadd.s32 %s2027, %s2028
      %s2030 = smul.addr %s2029, 8
      %s2031 = scalar_lea.vmem %s8, %s2030
      // Predicated region
      $region49: #{tpu_custom_call.1} parent=47 // pred_check
        %p2032 = pneg %p234
      $region50: #{tpu_custom_call.1} parent=47 // pred_check_branch
        %2034 = sbr.rel (%p2032) target = $region52
      $region51: #{tpu_custom_call.1} parent=47 // pred_region
        _
      $region52: #{tpu_custom_call.1} parent=47 // pred_fallthru
        _
      // Predicated region
      $region53: #{tpu_custom_call.1} parent=47 // pred_check
        %p2035 = pneg %p262
      $region54: #{tpu_custom_call.1} parent=47 // pred_check_branch
        %2037 = sbr.rel (%p2035) target = $region56
      $region55: #{tpu_custom_call.1} parent=47 // pred_region
        _
      $region56: #{tpu_custom_call.1} parent=47 // pred_fallthru
        _
    $region48: #{tpu_custom_call.1} parent=5 // pred_fallthru
      _
    %p2038 = scmp.le.s32.totalorder 2, %s15
    // Predicated region
    $region57: #{tpu_custom_call.1} parent=5 // pred_check
      %p2039 = pneg %p2038
    $region58: #{tpu_custom_call.1} parent=5 // pred_check_branch
      %2041 = sbr.rel (%p2039) target = $region60
    $region59: #{tpu_custom_call.1} parent=5 // pred_region
      %s2042 = ssub.s32 %s15, 2
      // Predicated region
      $region61: #{tpu_custom_call.1} parent=59 // pred_check
        %p2043 = pneg %p240
      $region62: #{tpu_custom_call.1} parent=59 // pred_check_branch
        %2045 = sbr.rel (%p2043) target = $region64
      $region63: #{tpu_custom_call.1} parent=59 // pred_region
        %p2046 = scmp.lt.s32.totalorder %s26, 1
        %s2047 = scalar_select %p2046, %s26, 1
        %p2048 = scmp.lt.s32.totalorder %s27, 0
        %s2049 = scalar_select %p2048, %s27, 0
        %s2050 = smul.addr %s2047, 8
        %s2051 = sadd.s32 %s2049, %s2050
        %s2052 = smul.addr %s2051, 4
        %s2053 = scalar_lea.vmem %s7, %s2052
      $region64: #{tpu_custom_call.1} parent=59 // pred_fallthru
        _
      // Predicated region
      $region65: #{tpu_custom_call.1} parent=59 // pred_check
        %p2054 = pneg %p268
      $region66: #{tpu_custom_call.1} parent=59 // pred_check_branch
        %2056 = sbr.rel (%p2054) target = $region68
      $region67: #{tpu_custom_call.1} parent=59 // pred_region
        %p2057 = scmp.lt.s32.totalorder %s26, 1
        %s2058 = scalar_select %p2057, %s26, 1
        %p2059 = scmp.lt.s32.totalorder %s27, 0
        %s2060 = scalar_select %p2059, %s27, 0
        %s2061 = smul.addr %s2058, 8
        %s2062 = sadd.s32 %s2060, %s2061
        %s2063 = smul.addr %s2062, 8
        %s2064 = scalar_lea.vmem %s8, %s2063
      $region68: #{tpu_custom_call.1} parent=59 // pred_fallthru
        _
    $region60: #{tpu_custom_call.1} parent=5 // pred_fallthru
      _
  $region6: #{tpu_custom_call.1} parent=0 // loop_footer
    %s19 = sadd.s32 1, %s15
  $region7: #{tpu_custom_call.1} parent=0 // loop_footer_branch
    %14 = sbr.rel target = $region3
  $region8: #{tpu_custom_call.1} parent=0 // loop_exit
    _

</llo_original>
